<compile_context>
chip_gen: v5e
topology: v5e:2x2
jax: 0.10.0
libtpu: 0.0.40
codegen_flags: <defaults>
</compile_context>

<pallas_src>
import functools
import math

import numpy as np

import jax
import jax.numpy as jnp
from jax import lax
from jax.experimental import pallas as pl
from jax.experimental.pallas import tpu as pltpu


def _default_vmem_limit():
    """Generation-aware scoped-VMEM budget (~3/4 of per-core VMEM):
    v7x: 64 MiB/TC -> 48 MiB;  v5e/v6e: 128 MiB -> 96 MiB."""
    try:
        cap = int(pltpu.get_tpu_info().vmem_capacity_bytes)
    except Exception:                      # conservative fallback if the query fails
        cap = 64 * 1024 * 1024
    return max(32 * 1024 * 1024, (cap * 3) // 4)


_VMEM_LIMIT = _default_vmem_limit()

# Narrower layers go through im2col so the matmul K is kh*kw*Cin (better MXU depth).
# TODO(synk): in-kernel kw/kh tap packing would give the same K without the XLA im2col.
_DIRECT_CONV_MIN_CIN = 48
_CONV_ACC_BUDGET = 8 * 1024 * 1024          # f32 accumulator budget per conv H-tile
_GN_SINGLE_BLOCK_BYTES = 8 * 1024 * 1024    # above this GroupNorm uses the tiled path
_GN_TILE_BUDGET = 4 * 1024 * 1024


def _round_up(n, m):
    return ((n + m - 1) // m) * m


def _choose_tm(m, cap=512):
    """Pick an M tile; prefer >=2 blocks so v7x's two TensorCores both get work."""
    if m % 8 != 0 or m < 16:
        return m
    for t in (512, 256, 128, 64, 32, 16, 8):
        if t <= min(cap, m // 2) and m % t == 0:
            return t
    return m


def _divisor_tile(total, unit, max_units):
    """Largest divisor d of `total` with (d*unit) % 8 == 0 (or d == total) and
    d <= max_units; prefers leaving >= 2 grid steps for pipelining / megacore."""
    cands = [d for d in range(1, total + 1)
             if total % d == 0 and ((d * unit) % 8 == 0 or d == total)
             and d <= max_units]
    if not cands:
        return total
    multi = [d for d in cands if total // d >= 2]
    return max(multi) if multi else max(cands)


def _epilogue(y, act, res, g, bt):
    # Fixed epilogue order: bias (added by caller) -> activation -> residual -> FiLM.
    # This matches every call site in this model (conv1/norm use act only; conv2 uses
    # residual (+ optional FiLM) only) -- do not reorder for other callers.
    if act == "silu":
        y = y * jax.nn.sigmoid(y)
    if res is not None:
        y = y + res.astype(jnp.float32)
    if g is not None:
        y = y * g + bt
    return y


# ----------------------------------------------------------------------------
# Fused matmul: y = epilogue(x @ w + b)
# ----------------------------------------------------------------------------
def _mm_single_kernel(*refs, act, has_res, has_film):
    x_ref, w_ref, b_ref = refs[:3]
    idx = 3
    res_ref = g_ref = bt_ref = None
    if has_res:
        res_ref = refs[idx]
        idx += 1
    if has_film:
        g_ref, bt_ref = refs[idx], refs[idx + 1]
        idx += 2
    o_ref = refs[idx]
    y = jnp.dot(x_ref[...], w_ref[...], preferred_element_type=jnp.float32) + b_ref[...]
    y = _epilogue(y, act,
                  res_ref[...] if has_res else None,
                  g_ref[...] if has_film else None,
                  bt_ref[...] if has_film else None)
    o_ref[...] = y.astype(o_ref.dtype)


def _mm_ktiled_kernel(*refs, nk, act, has_res, has_film):
    x_ref, w_ref, b_ref = refs[:3]
    idx = 3
    res_ref = g_ref = bt_ref = None
    if has_res:
        res_ref = refs[idx]
        idx += 1
    if has_film:
        g_ref, bt_ref = refs[idx], refs[idx + 1]
        idx += 2
    o_ref, acc_ref = refs[idx], refs[idx + 1]

    k = pl.program_id(1)
    contrib = jnp.dot(x_ref[...], w_ref[...], preferred_element_type=jnp.float32)

    # First K step writes the partial product directly (no zero-init store pass).
    @pl.when(k == 0)
    def _():
        acc_ref[...] = contrib

    @pl.when(k > 0)
    def _():
        acc_ref[...] += contrib

    @pl.when(k == nk - 1)
    def _():
        y = acc_ref[...] + b_ref[...]
        y = _epilogue(y, act,
                      res_ref[...] if has_res else None,
                      g_ref[...] if has_film else None,
                      bt_ref[...] if has_film else None)
        o_ref[...] = y.astype(o_ref.dtype)


def matmul_fused(x, w, b, act=None, residual=None, gamma=None, beta=None,
                 out_dtype=jnp.bfloat16):
    """bf16 operands / f32 accumulation.  Output channels are padded to a multiple of
    128 (lane-dense stores) and sliced in the wrapper; K > 1024 is tiled on an
    "arbitrary" grid axis with a VMEM accumulator."""
    M, K = x.shape
    Kw, N = w.shape
    assert Kw == K and b.shape == (N,)
    Np = _round_up(N, 128)
    x = x.astype(jnp.bfloat16)
    wp = jnp.pad(w.astype(jnp.bfloat16), ((0, 0), (0, Np - N)))
    bp = jnp.pad(b.astype(jnp.float32), (0, Np - N)).reshape(1, Np)
    # TODO(synk): weights / bias / FiLM rows could be pre-padded & pre-cast once at
    #             init, and activations kept channel-padded end-to-end, to drop these
    #             per-call pads and the trailing slice.

    if K <= 1024:
        tk, Kp = K, K
    else:
        tk = 512
        Kp = _round_up(K, tk)
        x = jnp.pad(x, ((0, 0), (0, Kp - K)))
        wp = jnp.pad(wp, ((0, Kp - K), (0, 0)))
    nk = Kp // tk
    tm = _choose_tm(M)
    nm = M // tm

    has_res = residual is not None
    has_film = gamma is not None
    rp = None
    if has_res:
        rp = residual.astype(jnp.bfloat16)
        if rp.shape[1] != Np:
            rp = jnp.pad(rp, ((0, 0), (0, Np - rp.shape[1])))
    gp = btp = None
    if has_film:
        gp = jnp.pad(gamma.astype(jnp.float32), (0, Np - N),
                     constant_values=1.0).reshape(1, Np)
        btp = jnp.pad(beta.astype(jnp.float32), (0, Np - N)).reshape(1, Np)

    if nk == 1:
        inputs = [x, wp, bp]
        in_specs = [pl.BlockSpec((tm, tk), lambda i: (i, 0)),
                    pl.BlockSpec((tk, Np), lambda i: (0, 0)),
                    pl.BlockSpec((1, Np), lambda i: (0, 0))]
        if has_res:
            inputs.append(rp)
            in_specs.append(pl.BlockSpec((tm, Np), lambda i: (i, 0)))
        if has_film:
            inputs += [gp, btp]
            in_specs += [pl.BlockSpec((1, Np), lambda i: (0, 0))] * 2
        out = pl.pallas_call(
            functools.partial(_mm_single_kernel, act=act, has_res=has_res,
                              has_film=has_film),
            grid=(nm,),
            in_specs=in_specs,
            out_specs=pl.BlockSpec((tm, Np), lambda i: (i, 0)),
            out_shape=jax.ShapeDtypeStruct((M, Np), out_dtype),
            compiler_params=pltpu.CompilerParams(
                dimension_semantics=("parallel",),
                vmem_limit_bytes=_VMEM_LIMIT),
        )(*inputs)
    else:
        inputs = [x, wp, bp]
        in_specs = [pl.BlockSpec((tm, tk), lambda i, k: (i, k)),
                    # TODO(synk): on v7x, pipeline_mode=pl.Buffered(3) on this weight
                    #             spec can hide the K-step DMA once VMEM allows it.
                    pl.BlockSpec((tk, Np), lambda i, k: (k, 0)),
                    pl.BlockSpec((1, Np), lambda i, k: (0, 0))]
        if has_res:
            inputs.append(rp)
            in_specs.append(pl.BlockSpec((tm, Np), lambda i, k: (i, 0)))
        if has_film:
            inputs += [gp, btp]
            in_specs += [pl.BlockSpec((1, Np), lambda i, k: (0, 0))] * 2
        out = pl.pallas_call(
            functools.partial(_mm_ktiled_kernel, nk=nk, act=act, has_res=has_res,
                              has_film=has_film),
            grid=(nm, nk),
            in_specs=in_specs,
            out_specs=pl.BlockSpec((tm, Np), lambda i, k: (i, 0)),
            out_shape=jax.ShapeDtypeStruct((M, Np), out_dtype),
            scratch_shapes=[pltpu.VMEM((tm, Np), jnp.float32)],
            compiler_params=pltpu.CompilerParams(
                dimension_semantics=("parallel", "arbitrary"),
                vmem_limit_bytes=_VMEM_LIMIT),
        )(*inputs)
    return out[:, :N] if Np != N else out


# ----------------------------------------------------------------------------
# Direct conv kernel: whole padded image resident per batch, output tiled over rows,
# tap loop accumulates in a traced f32 value (single store in the epilogue).
# ----------------------------------------------------------------------------
def _conv_kernel(*refs, taps, th, Wo, Cin, act, has_res, has_film):
    x_ref, w_ref, b_ref = refs[:3]
    idx = 3
    res_ref = g_ref = bt_ref = None
    if has_res:
        res_ref = refs[idx]
        idx += 1
    if has_film:
        g_ref, bt_ref = refs[idx], refs[idx + 1]
        idx += 2
    o_ref = refs[idx]

    kh, kw = taps
    row0 = pl.program_id(1) * th
    acc = None
    for t in range(kh * kw):
        di, dj = divmod(t, kw)
        patch = x_ref[0, pl.ds(row0 + di, th), dj:dj + Wo, :]     # (th, Wo, Cin)
        # TODO(synk): this (th, Wo, Cin)->(th*Wo, Cin) collapse is a VMEM relayout per
        #             tap; a channel-contracting dot_general on the 3-D value (or
        #             in-VMEM tap packing) would remove it.
        patch = patch.reshape(th * Wo, Cin)
        wt = w_ref[t * Cin:(t + 1) * Cin, :]                      # (Cin, Np)
        contrib = jnp.dot(patch, wt, preferred_element_type=jnp.float32)
        acc = contrib if acc is None else acc + contrib           # traced f32 value
    y = acc + b_ref[...]
    y = _epilogue(y, act,
                  res_ref[0] if has_res else None,
                  g_ref[0] if has_film else None,
                  bt_ref[0] if has_film else None)
    o_ref[0] = y.astype(o_ref.dtype)


def _conv2d_direct(x, w, b, padding, Ho, Wo, *, act, residual, gamma, beta):
    """Stride-1 direct conv.  The padded per-batch image block index_map ignores the
    row-tile axis so it is DMA'd once per batch and stays resident; output / residual
    / FiLM blocks are H-tiled so the f32 working set stays under _CONV_ACC_BUDGET
    (v7x VMEM) and there are >= 2 grid steps to pipeline."""
    B, H, W, Cin = x.shape
    kh, kw, _, Cout = w.shape
    Np = _round_up(Cout, 128)
    Hp, Wp = H + 2 * padding, W + 2 * padding
    th = _divisor_tile(Ho, Wo, max(1, _CONV_ACC_BUDGET // (Wo * Np * 4)))
    nh = Ho // th
    HWo = Ho * Wo
    xp = jnp.pad(x.astype(jnp.bfloat16),
                 ((0, 0), (padding, padding), (padding, padding), (0, 0)))
    wp = jnp.pad(w.astype(jnp.bfloat16).reshape(kh * kw * Cin, Cout),
                 ((0, 0), (0, Np - Cout)))
    bp = jnp.pad(b.astype(jnp.float32), (0, Np - Cout)).reshape(1, Np)

    inputs = [xp, wp, bp]
    in_specs = [
        pl.BlockSpec((1, Hp, Wp, Cin), lambda n, h: (n, 0, 0, 0)),   # resident over h
        pl.BlockSpec((kh * kw * Cin, Np), lambda n, h: (0, 0)),
        pl.BlockSpec((1, Np), lambda n, h: (0, 0)),
    ]
    has_res = residual is not None
    if has_res:
        rp = jnp.pad(residual.astype(jnp.bfloat16).reshape(B, HWo, Cout),
                     ((0, 0), (0, 0), (0, Np - Cout)))
        inputs.append(rp)
        in_specs.append(pl.BlockSpec((1, th * Wo, Np), lambda n, h: (n, h, 0)))
    has_film = gamma is not None
    if has_film:
        inputs.append(jnp.pad(gamma.astype(jnp.float32), (0, Np - Cout),
                              constant_values=1.0).reshape(1, 1, Np))
        inputs.append(jnp.pad(beta.astype(jnp.float32),
                              (0, Np - Cout)).reshape(1, 1, Np))
        in_specs += [pl.BlockSpec((1, 1, Np), lambda n, h: (0, 0, 0))] * 2

    out = pl.pallas_call(
        functools.partial(_conv_kernel, taps=(kh, kw), th=th, Wo=Wo, Cin=Cin,
                          act=act, has_res=has_res, has_film=has_film),
        grid=(B, nh),
        in_specs=in_specs,
        out_specs=pl.BlockSpec((1, th * Wo, Np), lambda n, h: (n, h, 0)),
        out_shape=jax.ShapeDtypeStruct((B, HWo, Np), jnp.bfloat16),
        compiler_params=pltpu.CompilerParams(
            dimension_semantics=("parallel", "arbitrary"),
            vmem_limit_bytes=_VMEM_LIMIT),
    )(*inputs)
    return out[:, :, :Cout].reshape(B, Ho, Wo, Cout)


def _conv2d_im2col(x, w, b, stride, padding, Ho, Wo, *, act, residual, gamma, beta):
    """im2col + fused matmul: used for narrow-Cin layers (K = kh*kw*Cin fills the MXU
    contraction depth) and the three stride-2 downsample convs.
    TODO(synk): the stride-2 convs still materialize a 9x-expanded cols matrix in HBM;
                an in-kernel strided-tap direct conv would read the input once."""
    B, H, W, Cin = x.shape
    kh, kw, _, Cout = w.shape
    xp = jnp.pad(x.astype(jnp.bfloat16),
                 ((0, 0), (padding, padding), (padding, padding), (0, 0)))
    patches = []
    for i in range(kh):
        for j in range(kw):
            patches.append(lax.slice(
                xp, (0, i, j, 0),
                (B, i + (Ho - 1) * stride + 1, j + (Wo - 1) * stride + 1, Cin),
                (1, stride, stride, 1)))
    cols = jnp.concatenate(patches, axis=-1).reshape(B * Ho * Wo, kh * kw * Cin)
    res2 = residual.reshape(B * Ho * Wo, -1) if residual is not None else None
    out = matmul_fused(cols, w.reshape(kh * kw * Cin, Cout), b, act=act,
                       residual=res2, gamma=gamma, beta=beta)
    return out.reshape(B, Ho, Wo, Cout)


def conv2d(x, w, b, stride=1, padding=1, act=None, residual=None, gamma=None,
           beta=None):
    """w: (kh, kw, Cin, Cout); NHWC in/out; optional fused SiLU / residual / FiLM.
    Static dispatch only (no try/except; Mosaic failures under jit would escape it)."""
    B, H, W, Cin = x.shape
    kh, kw, _, Cout = w.shape
    Ho = (H + 2 * padding - kh) // stride + 1
    Wo = (W + 2 * padding - kw) // stride + 1
    if kh == 1 and kw == 1 and padding == 0 and stride == 1:
        res2 = residual.reshape(B * H * W, -1) if residual is not None else None
        out = matmul_fused(x.reshape(B * H * W, Cin), w.reshape(Cin, Cout), b,
                           act=act, residual=res2, gamma=gamma, beta=beta)
        return out.reshape(B, Ho, Wo, Cout)
    if stride == 1 and Wo % 8 == 0 and Cin >= _DIRECT_CONV_MIN_CIN:
        return _conv2d_direct(x, w, b, padding, Ho, Wo, act=act, residual=residual,
                              gamma=gamma, beta=beta)
    return _conv2d_im2col(x, w, b, stride, padding, Ho, Wo, act=act,
                          residual=residual, gamma=gamma, beta=beta)


# ----------------------------------------------------------------------------
# GroupNorm: fused single-pass kernel (reduce over HW first, tiny P matmul for the
# group combine) plus an HW-tiled two-pass path for large blocks (v7x VMEM).
# ----------------------------------------------------------------------------
def _gn_kernel(*refs, inv_cnt, eps, act, has_pre):
    x_ref, p_ref, g_ref, b_ref = refs[:4]
    idx = 4
    pre_ref = None
    if has_pre:
        pre_ref = refs[idx]
        idx += 1
    o_ref = refs[idx]

    x = x_ref[0].astype(jnp.float32)                     # (HW, C)
    if has_pre:
        x = x + pre_ref[0]                               # (1, C) time-emb broadcast
    C = x.shape[1]
    # Reduce over HW first (cheap sublane reduction), then combine channels of the
    # same group with a tiny (8, C) x (C, C) indicator matmul.  P is a precomputed
    # constant (not rebuilt per grid step).
    s1 = jnp.sum(x, axis=0, keepdims=True)               # (1, C)
    mean = jnp.dot(jnp.broadcast_to(s1, (8, C)), p_ref[...],
                   preferred_element_type=jnp.float32)[0:1] * inv_cnt
    xc = x - mean
    s2 = jnp.sum(xc * xc, axis=0, keepdims=True)         # (1, C)
    var = jnp.dot(jnp.broadcast_to(s2, (8, C)), p_ref[...],
                  preferred_element_type=jnp.float32)[0:1] * inv_cnt
    y = xc * lax.rsqrt(var + eps) * g_ref[0] + b_ref[0]
    if act == "silu":
        y = y * jax.nn.sigmoid(y)
    o_ref[0] = y.astype(o_ref.dtype)


def _gn_stats_kernel(x_ref, o_ref):
    """Per-channel sum / sum-of-squares, accumulated across the HW grid axis directly
    in the resident f32 output block (first step writes, later steps add)."""
    x = x_ref[0].astype(jnp.float32)                     # (thw, C)
    s = jnp.sum(x, axis=0, keepdims=True)
    sq = jnp.sum(x * x, axis=0, keepdims=True)

    @pl.when(pl.program_id(1) == 0)
    def _():
        o_ref[0, 0:1, :] = s
        o_ref[0, 1:2, :] = sq

    @pl.when(pl.program_id(1) > 0)
    def _():
        o_ref[0, 0:1, :] = o_ref[0, 0:1, :] + s
        o_ref[0, 1:2, :] = o_ref[0, 1:2, :] + sq


def _gn_apply_kernel(x_ref, s_ref, t_ref, o_ref, *, act):
    y = x_ref[0].astype(jnp.float32) * s_ref[0] + t_ref[0]
    if act == "silu":
        y = y * jax.nn.sigmoid(y)
    o_ref[0] = y.astype(o_ref.dtype)


def group_norm(x_nhwc, gamma, beta, num_groups, eps=1e-5, act=None, pre_add=None,
               tiled=None):
    B, H, W, C = x_nhwc.shape
    HW = H * W
    Cg = C // num_groups
    if tiled is None:
        tiled = HW * C * 4 > _GN_SINGLE_BLOCK_BYTES
    x2 = x_nhwc.reshape(B, HW, C).astype(jnp.bfloat16)
    gamma_f = gamma.astype(jnp.float32)
    beta_f = beta.astype(jnp.float32)

    if not tiled:
        grp = np.arange(C) // Cg                              # numpy -> baked constant
        P = jnp.asarray((grp[:, None] == grp[None, :]).astype(np.float32))
        inputs = [x2, P, gamma_f.reshape(1, 1, C), beta_f.reshape(1, 1, C)]
        in_specs = [pl.BlockSpec((1, HW, C), lambda b: (b, 0, 0)),
                    pl.BlockSpec((C, C), lambda b: (0, 0)),
                    pl.BlockSpec((1, 1, C), lambda b: (0, 0, 0)),
                    pl.BlockSpec((1, 1, C), lambda b: (0, 0, 0))]
        has_pre = pre_add is not None
        if has_pre:
            inputs.append(pre_add.astype(jnp.float32).reshape(B, 1, C))
            in_specs.append(pl.BlockSpec((1, 1, C), lambda b: (b, 0, 0)))
        out = pl.pallas_call(
            functools.partial(_gn_kernel, inv_cnt=1.0 / float(HW * Cg), eps=eps,
                              act=act, has_pre=has_pre),
            grid=(B,),
            in_specs=in_specs,
            out_specs=pl.BlockSpec((1, HW, C), lambda b: (b, 0, 0)),
            out_shape=jax.ShapeDtypeStruct((B, HW, C), jnp.bfloat16),
            compiler_params=pltpu.CompilerParams(
                dimension_semantics=("parallel",), vmem_limit_bytes=_VMEM_LIMIT),
        )(*inputs)
        return out.reshape(B, H, W, C)

    # --- tiled two-pass path (large HW blocks / v7x VMEM) ---
    thw = _divisor_tile(HW, 1, max(8, _GN_TILE_BUDGET // (C * 4)))
    nhw = HW // thw
    stats = pl.pallas_call(
        _gn_stats_kernel,
        grid=(B, nhw),
        in_specs=[pl.BlockSpec((1, thw, C), lambda b, h: (b, h, 0))],
        out_specs=pl.BlockSpec((1, 2, C), lambda b, h: (b, 0, 0)),
        out_shape=jax.ShapeDtypeStruct((B, 2, C), jnp.float32),
        compiler_params=pltpu.CompilerParams(
            dimension_semantics=("parallel", "arbitrary"),
            vmem_limit_bytes=_VMEM_LIMIT),
    )(x2)
    s, sq = stats[:, 0, :], stats[:, 1, :]                        # (B, C)
    if pre_add is not None:
        p = pre_add.astype(jnp.float32).reshape(B, C)
        sq = sq + 2.0 * p * s + float(HW) * p * p                 # stats of (x + pre)
        s = s + float(HW) * p
    cnt = float(HW * Cg)
    gs = jnp.sum(s.reshape(B, num_groups, Cg), axis=-1) / cnt     # group mean
    gsq = jnp.sum(sq.reshape(B, num_groups, Cg), axis=-1) / cnt   # group E[x^2]
    rstd = lax.rsqrt(jnp.maximum(gsq - gs * gs, 0.0) + eps)
    mean_c = jnp.repeat(gs, Cg, axis=-1)                          # (B, C)
    rstd_c = jnp.repeat(rstd, Cg, axis=-1)
    scale = rstd_c * gamma_f[None, :]
    shift = beta_f[None, :] - mean_c * scale
    if pre_add is not None:
        shift = shift + p * scale                                 # fold the pre-add in
    out = pl.pallas_call(
        functools.partial(_gn_apply_kernel, act=act),
        grid=(B, nhw),
        in_specs=[pl.BlockSpec((1, thw, C), lambda b, h: (b, h, 0)),
                  pl.BlockSpec((1, 1, C), lambda b, h: (b, 0, 0)),
                  pl.BlockSpec((1, 1, C), lambda b, h: (b, 0, 0))],
        out_specs=pl.BlockSpec((1, thw, C), lambda b, h: (b, h, 0)),
        out_shape=jax.ShapeDtypeStruct((B, HW, C), jnp.bfloat16),
        compiler_params=pltpu.CompilerParams(
            dimension_semantics=("parallel", "parallel"),
            vmem_limit_bytes=_VMEM_LIMIT),
    )(x2, scale.reshape(B, 1, C), shift.reshape(B, 1, C))
    return out.reshape(B, H, W, C)


# ----------------------------------------------------------------------------
# Standalone FiLM (lane-packed) and per-batch broadcast-add (+FiLM) kernels
# ----------------------------------------------------------------------------
def _film_kernel(x_ref, g_ref, b_ref, o_ref):
    o_ref[...] = (x_ref[...].astype(jnp.float32) * g_ref[...]
                  + b_ref[...]).astype(o_ref.dtype)


def film(x_nhwc, gamma, beta):
    """FiLM: gamma[c]*x + beta[c].  k rows are folded into the lane axis so the output
    last dim is >= 128 and stores are unmasked."""
    B, H, W, C = x_nhwc.shape
    M = B * H * W
    k = math.gcd(M, max(1, 128 // C)) if C < 128 else 1
    M2, C2 = M // k, k * C
    x2 = x_nhwc.reshape(M2, C2).astype(jnp.bfloat16)
    g2 = jnp.tile(gamma.astype(jnp.float32), k).reshape(1, C2)
    b2 = jnp.tile(beta.astype(jnp.float32), k).reshape(1, C2)
    tm = _choose_tm(M2, cap=1024)
    out = pl.pallas_call(
        _film_kernel,
        grid=(M2 // tm,),
        in_specs=[pl.BlockSpec((tm, C2), lambda i: (i, 0)),
                  pl.BlockSpec((1, C2), lambda i: (0, 0)),
                  pl.BlockSpec((1, C2), lambda i: (0, 0))],
        out_specs=pl.BlockSpec((tm, C2), lambda i: (i, 0)),
        out_shape=jax.ShapeDtypeStruct((M2, C2), jnp.bfloat16),
        compiler_params=pltpu.CompilerParams(
            dimension_semantics=("parallel",), vmem_limit_bytes=_VMEM_LIMIT),
    )(x2, g2, b2)
    return out.reshape(B, H, W, C)


def _badd_kernel(*refs, has_film):
    x_ref, v_ref = refs[0], refs[1]
    idx = 2
    g_ref = bt_ref = None
    if has_film:
        g_ref, bt_ref = refs[idx], refs[idx + 1]
        idx += 2
    o_ref = refs[idx]
    y = x_ref[0].astype(jnp.float32) + v_ref[0]
    if has_film:
        y = y * g_ref[0] + bt_ref[0]
    o_ref[0] = y.astype(o_ref.dtype)


def add_batch_vec(x_nhwc, vec, gamma=None, beta=None):
    """x + vec[:, None, None, :] (+ optional fused FiLM), lane-packed."""
    B, H, W, C = x_nhwc.shape
    HW = H * W
    k = math.gcd(HW, max(1, 128 // C)) if C < 128 else 1
    HW2, C2 = HW // k, k * C
    x2 = x_nhwc.reshape(B, HW2, C2).astype(jnp.bfloat16)
    v2 = jnp.tile(vec.astype(jnp.float32), (1, k)).reshape(B, 1, C2)
    inputs = [x2, v2]
    in_specs = [pl.BlockSpec((1, HW2, C2), lambda b: (b, 0, 0)),
                pl.BlockSpec((1, 1, C2), lambda b: (b, 0, 0))]
    has_film = gamma is not None
    if has_film:
        inputs.append(jnp.tile(gamma.astype(jnp.float32), k).reshape(1, 1, C2))
        inputs.append(jnp.tile(beta.astype(jnp.float32), k).reshape(1, 1, C2))
        in_specs += [pl.BlockSpec((1, 1, C2), lambda b: (0, 0, 0))] * 2
    out = pl.pallas_call(
        functools.partial(_badd_kernel, has_film=has_film),
        grid=(B,),
        in_specs=in_specs,
        out_specs=pl.BlockSpec((1, HW2, C2), lambda b: (b, 0, 0)),
        out_shape=jax.ShapeDtypeStruct((B, HW2, C2), jnp.bfloat16),
        compiler_params=pltpu.CompilerParams(
            dimension_semantics=("parallel",), vmem_limit_bytes=_VMEM_LIMIT),
    )(*inputs)
    return out.reshape(B, H, W, C)


# ----------------------------------------------------------------------------
# Parameter construction (deterministic, shapes follow the module structure)
# ----------------------------------------------------------------------------
class ParamFactory:
    def __init__(self, seed=0):
        self.key = jax.random.PRNGKey(seed)
        self.count = 0

    def _k(self):
        self.count += 1
        return jax.random.fold_in(self.key, self.count)

    def dense(self, cin, cout):
        w = jax.random.normal(self._k(), (cin, cout), jnp.float32) / math.sqrt(cin)
        return {"w": w, "b": jnp.zeros((cout,), jnp.float32)}

    def conv(self, kh, kw, cin, cout):
        w = jax.random.normal(self._k(), (kh, kw, cin, cout),
                              jnp.float32) / math.sqrt(kh * kw * cin)
        return {"w": w, "b": jnp.zeros((cout,), jnp.float32)}

    def norm(self, c):
        return {"gamma": jnp.ones((c,), jnp.float32),
                "beta": jnp.zeros((c,), jnp.float32)}

    def embedding(self, n, d):
        return jax.random.normal(self._k(), (n, d), jnp.float32)


def init_params(cfg):
    pf = ParamFactory(0)
    D = cfg["writer_embed_dim"]
    Dctx = D * 4
    C = cfg["block_out_channels"]
    Temb = cfg["time_embedding_dim"]
    L = cfg["layers_per_block"]

    def resnet(cin, cout):
        return {
            "norm1": pf.norm(cin),
            "conv1": pf.conv(3, 3, cin, cout),
            "time_emb_proj": pf.dense(Temb, cout),
            "norm2": pf.norm(cout),
            "conv2": pf.conv(3, 3, cout, cout),
            "shortcut": pf.conv(1, 1, cin, cout) if cin != cout else None,
        }

    def xattn(c):
        return {"q": pf.dense(c, c), "k": pf.dense(Dctx, c),
                "v": pf.dense(Dctx, c), "o": pf.dense(c, c)}

    p = {
        "writer_embedding": pf.embedding(cfg["num_writers"] + 1, D),
        "writer_proj": [pf.dense(D, Dctx), pf.dense(Dctx, Dctx)],
    }

    unet = {
        "time_embedding": [pf.dense(C[0], Temb), pf.dense(Temb, Temb)],
        "conv_in": pf.conv(3, 3, cfg["in_channels"], C[0]),
    }

    # down blocks: ('CrossAttnDown', 'CrossAttnDown', 'CrossAttnDown', 'Down')
    has_xattn_down = [True, True, True, False]
    down, ch = [], C[0]
    skip_channels = [C[0]]                       # conv_in output
    for i, cout in enumerate(C):
        blk = {"resnets": [], "attns": [], "film": pf.norm(cout)}
        for j in range(L):
            cin = ch if j == 0 else cout
            blk["resnets"].append(resnet(cin, cout))
            if has_xattn_down[i]:
                blk["attns"].append(xattn(cout))
            skip_channels.append(cout)
        if i != len(C) - 1:
            blk["downsample"] = pf.conv(3, 3, cout, cout)
            skip_channels.append(cout)
        else:
            blk["downsample"] = None
        down.append(blk)
        ch = cout
    unet["down"] = down

    unet["mid"] = {"resnet1": resnet(C[-1], C[-1]), "attn": xattn(C[-1]),
                   "resnet2": resnet(C[-1], C[-1]), "film": pf.norm(C[-1])}

    # up blocks: ('Up', 'CrossAttnUp', 'CrossAttnUp', 'CrossAttnUp')
    has_xattn_up = [False, True, True, True]
    rev = list(reversed(C))
    up, ch = [], C[-1]
    for i, cout in enumerate(rev):
        blk = {"resnets": [], "attns": [], "film": pf.norm(cout)}
        for j in range(L + 1):
            skip = skip_channels.pop()
            blk["resnets"].append(resnet(ch + skip, cout))
            if has_xattn_up[i]:
                blk["attns"].append(xattn(cout))
            ch = cout
        blk["upsample"] = pf.conv(3, 3, cout, cout) if i != len(rev) - 1 else None
        up.append(blk)
    unet["up"] = up

    unet["conv_norm_out"] = pf.norm(C[0])
    unet["conv_out"] = pf.conv(3, 3, C[0], cfg["out_channels"])
    p["unet"] = unet
    return p


# ----------------------------------------------------------------------------
# Forward pass
# ----------------------------------------------------------------------------
def timestep_embedding(timesteps, dim, max_period=10000.0):
    half = dim // 2
    freqs = jnp.exp(-math.log(max_period) * jnp.arange(half, dtype=jnp.float32) / half)
    args = timesteps.astype(jnp.float32)[:, None] * freqs[None, :]
    return jnp.concatenate([jnp.cos(args), jnp.sin(args)], axis=-1)   # flip_sin_to_cos


def resnet_forward(p, x, emb_silu, groups, film_gb=None):
    # GroupNorm+SiLU fused; time-emb add fused as norm2's pre-add; shortcut residual
    # (and optional FiLM) fused into conv2's epilogue.
    h = group_norm(x, p["norm1"]["gamma"], p["norm1"]["beta"], groups, act="silu")
    h = conv2d(h, p["conv1"]["w"], p["conv1"]["b"], padding=1)
    t = matmul_fused(emb_silu, p["time_emb_proj"]["w"], p["time_emb_proj"]["b"])
    h = group_norm(h, p["norm2"]["gamma"], p["norm2"]["beta"], groups, act="silu",
                   pre_add=t)
    if p["shortcut"] is not None:
        B, H, W, Cin = x.shape
        Cout = p["shortcut"]["w"].shape[-1]
        res = matmul_fused(x.reshape(B * H * W, Cin),
                           p["shortcut"]["w"].reshape(Cin, Cout),
                           p["shortcut"]["b"]).reshape(B, H, W, Cout)
    else:
        res = x
    g, bt = film_gb if film_gb is not None else (None, None)
    return conv2d(h, p["conv2"]["w"], p["conv2"]["b"], padding=1,
                  residual=res, gamma=g, beta=bt)


def cross_attn_forward(p, x, ctx, gamma=None, beta=None):
    B, H, W, C = x.shape
    S = ctx.shape[1]
    ctx2 = ctx.reshape(B * S, ctx.shape[-1])
    if S == 1:
        # softmax over a single key is identically 1 => attention output == to_out(V);
        # Q, K, scores and softmax cancel exactly and are skipped (bit-identical).
        v = matmul_fused(ctx2, p["v"]["w"], p["v"]["b"])            # (B, C)
        o = matmul_fused(v, p["o"]["w"], p["o"]["b"])               # (B, C)
        return add_batch_vec(x, o, gamma=gamma, beta=beta)          # x + o (+FiLM)
    # General S > 1 path (unused by GC_DDPM): batched K/V projection, softmax glue.
    q = matmul_fused(x.reshape(B * H * W, C), p["q"]["w"], p["q"]["b"])
    q = q.reshape(B, H * W, C).astype(jnp.float32)
    kv = matmul_fused(ctx2, jnp.concatenate([p["k"]["w"], p["v"]["w"]], axis=1),
                      jnp.concatenate([p["k"]["b"], p["v"]["b"]]))
    kv = kv.reshape(B, S, 2 * C).astype(jnp.float32)
    k_, v_ = kv[..., :C], kv[..., C:]
    attn = jax.nn.softmax(jnp.einsum("nqc,nkc->nqk", q, k_) / math.sqrt(C), axis=-1)
    o = jnp.einsum("nqk,nkc->nqc", attn, v_).reshape(B * H * W, C)
    o = matmul_fused(o, p["o"]["w"], p["o"]["b"]).reshape(B, H, W, C)
    out = (x.astype(jnp.float32) + o.astype(jnp.float32)).astype(jnp.bfloat16)
    if gamma is not None:
        out = film(out, gamma, beta)
    return out


def upsample_nearest_2x(x):
    return jnp.repeat(jnp.repeat(x, 2, axis=1), 2, axis=2)


def unet_forward(p, sample, timesteps, ctx, cfg):
    C = cfg["block_out_channels"]
    G = cfg["norm_num_groups"]

    t_emb = timestep_embedding(timesteps, C[0])
    emb = matmul_fused(t_emb, p["time_embedding"][0]["w"],
                       p["time_embedding"][0]["b"], act="silu")
    emb = matmul_fused(emb, p["time_embedding"][1]["w"], p["time_embedding"][1]["b"])
    emb_f = emb.astype(jnp.float32)
    emb_silu = emb_f * jax.nn.sigmoid(emb_f)          # SiLU(emb), reused by every resnet

    sample = conv2d(sample, p["conv_in"]["w"], p["conv_in"]["b"], padding=1)
    res_stack = [sample]

    for blk in p["down"]:
        for j, rn in enumerate(blk["resnets"]):
            sample = resnet_forward(rn, sample, emb_silu, G)
            if blk["attns"]:
                sample = cross_attn_forward(blk["attns"][j], sample, ctx)
            res_stack.append(sample)
        if blk["downsample"] is not None:
            sample = conv2d(sample, blk["downsample"]["w"], blk["downsample"]["b"],
                            stride=2, padding=1)
            res_stack.append(sample)
        # The pre-FiLM activation above lives on the skip stack, so FiLM is a
        # standalone lane-packed kernel here.
        # TODO(synk): emit raw + FiLMed outputs from the preceding conv epilogue (two
        #             pallas outputs) to save this extra HBM pass per down block.
        sample = film(sample, blk["film"]["gamma"], blk["film"]["beta"])

    m = p["mid"]
    sample = resnet_forward(m["resnet1"], sample, emb_silu, G)
    sample = cross_attn_forward(m["attn"], sample, ctx)
    # mid FiLM fused into resnet2's conv2 epilogue (after the residual add)
    sample = resnet_forward(m["resnet2"], sample, emb_silu, G,
                            film_gb=(m["film"]["gamma"], m["film"]["beta"]))

    for blk in p["up"]:
        n_res = len(blk["resnets"])
        film_g, film_b = blk["film"]["gamma"], blk["film"]["beta"]
        has_up = blk["upsample"] is not None
        for j, rn in enumerate(blk["resnets"]):
            skip = res_stack.pop()
            sample = jnp.concatenate([sample, skip], axis=-1)
            fuse_rn = (not has_up) and (not blk["attns"]) and (j == n_res - 1)
            sample = resnet_forward(rn, sample, emb_silu, G,
                                    film_gb=(film_g, film_b) if fuse_rn else None)
            if blk["attns"]:
                fuse_at = (not has_up) and (j == n_res - 1)
                sample = cross_attn_forward(blk["attns"][j], sample, ctx,
                                            gamma=film_g if fuse_at else None,
                                            beta=film_b if fuse_at else None)
        if has_up:
            sample = upsample_nearest_2x(sample)
            # up-block FiLM fused into the upsample conv epilogue
            sample = conv2d(sample, blk["upsample"]["w"], blk["upsample"]["b"],
                            padding=1, gamma=film_g, beta=film_b)

    sample = group_norm(sample, p["conv_norm_out"]["gamma"],
                        p["conv_norm_out"]["beta"], G, act="silu")
    sample = conv2d(sample, p["conv_out"]["w"], p["conv_out"]["b"], padding=1)
    return sample


def gc_ddpm_forward(params, x, glyph, timesteps, writer_ids, cfg):
    """x, glyph: NCHW float; timesteps: (B,) int; writer_ids: (B,) int."""
    x = x * 2.0 - 1.0
    glyph = glyph * 2.0 - 1.0
    w_emb = params["writer_embedding"][writer_ids]                     # (B, D) gather
    w_emb = w_emb / jnp.linalg.norm(w_emb, axis=-1, keepdims=True)
    w_emb = matmul_fused(w_emb, params["writer_proj"][0]["w"],
                         params["writer_proj"][0]["b"], act="silu")
    w_emb = matmul_fused(w_emb, params["writer_proj"][1]["w"],
                         params["writer_proj"][1]["b"])
    ctx = w_emb[:, None, :]                                            # (B, 1, 4D) bf16

    x_input = jnp.concatenate([x, glyph], axis=1).astype(jnp.float32)  # NCHW
    sample = jnp.transpose(x_input, (0, 2, 3, 1)).astype(jnp.bfloat16) # -> NHWC bf16
    out = unet_forward(params["unet"], sample, timesteps, ctx, cfg)
    out_nchw = jnp.transpose(out.astype(jnp.float32), (0, 3, 1, 2))
    c = out_nchw.shape[1] // 2
    return out_nchw[:, :c], out_nchw[:, c:]                            # torch.chunk(2)


# ----------------------------------------------------------------------------
if __name__ == "__main__":
    # Scaled-down config (structure matches GC_DDPM.__init__; widths reduced).
    cfg = dict(
        num_writers=8,
        writer_embed_dim=32,          # cross_attention_dim = 128
        image_size=16,
        max_width=32,
        in_channels=2,
        out_channels=2,
        block_out_channels=(16, 32, 32, 32),
        layers_per_block=2,
        norm_num_groups=2,
        time_embedding_dim=64,
    )
    params = init_params(cfg)

    key = jax.random.PRNGKey(0)
    keys = jax.random.split(key, 10)
    k1, k2, k3, k4, k5, k6, k7, k8, k9, k10 = keys

    # --- micro self-checks on the reworked kernels -------------------------------
    # 1) K-tiled matmul path (K > 1024, with K and N padding) vs an XLA reference.
    a = jax.random.normal(k5, (256, 1280), jnp.float32).astype(jnp.bfloat16)
    wm = (jax.random.normal(k6, (1280, 192), jnp.float32)
          / math.sqrt(1280.0)).astype(jnp.bfloat16)
    bm = jax.random.normal(k7, (192,), jnp.float32) * 0.1
    got = matmul_fused(a, wm, bm).astype(jnp.float32)
    ref = jnp.dot(a.astype(jnp.float32), wm.astype(jnp.float32)) + bm[None, :]
    assert float(jnp.max(jnp.abs(got - ref))) < 0.06

    # 2) GroupNorm: fused single-pass path and tiled two-pass path vs XLA reference.
    gx = jax.random.normal(k8, (2, 16, 32, 32), jnp.float32).astype(jnp.bfloat16)
    gpre = jax.random.normal(k9, (2, 32), jnp.float32) * 0.1
    ggam = 1.0 + 0.1 * jax.random.normal(k10, (32,), jnp.float32)
    gbet = jnp.zeros((32,), jnp.float32)
    xf = gx.astype(jnp.float32) + gpre[:, None, None, :]
    xg = xf.reshape(2, 16 * 32, 2, 16)
    mu = jnp.mean(xg, axis=(1, 3), keepdims=True)
    va = jnp.mean((xg - mu) ** 2, axis=(1, 3), keepdims=True)
    yr = ((xg - mu) * lax.rsqrt(va + 1e-5)).reshape(2, 16, 32, 32) * ggam + gbet
    gn_ref = yr * jax.nn.sigmoid(yr)
    for force_tiled in (False, True):
        gn_got = group_norm(gx.astype(jnp.float32), ggam, gbet, 2, act="silu",
                            pre_add=gpre, tiled=force_tiled).astype(jnp.float32)
        assert float(jnp.max(jnp.abs(gn_got - gn_ref))) < 0.08, force_tiled

    # --- full forward pass --------------------------------------------------------
    B, H, W = 2, cfg["image_size"], cfg["max_width"]
    x = jax.random.uniform(k1, (B, 1, H, W), jnp.float32)
    glyph = jax.random.uniform(k2, (B, 1, H, W), jnp.float32)
    timesteps = jax.random.randint(k3, (B,), 0, 1000)
    writer_ids = jax.random.randint(k4, (B,), 0, cfg["num_writers"])

    noise_pred, var_pred = gc_ddpm_forward(params, x, glyph, timesteps, writer_ids, cfg)
    jax.block_until_ready((noise_pred, var_pred))
    assert noise_pred.shape == (B, 1, H, W), noise_pred.shape
    assert var_pred.shape == (B, 1, H, W), var_pred.shape
    assert jnp.all(jnp.isfinite(noise_pred)) and jnp.all(jnp.isfinite(var_pred))
    print("KERNEL_OK")
</pallas_src>

<mosaic_0001>
module attributes {stable_mosaic.version = 11 : i64} {
  func.func @_mm_ktiled_kernel(%arg0: i32, %arg1: i32, %arg2: memref<128x512xbf16, #tpu.memory_space<vmem>>, %arg3: memref<512x256xbf16, #tpu.memory_space<vmem>>, %arg4: memref<1x256xf32, #tpu.memory_space<vmem>>, %arg5: memref<128x256xbf16, #tpu.memory_space<vmem>>, %arg6: memref<128x256xf32, #tpu.memory_space<vmem>>) attributes {dimension_semantics = [#tpu.dimension_semantics<parallel>, #tpu.dimension_semantics<arbitrary>], iteration_bounds = array<i64: 2, 3>, scalar_prefetch = 0 : i64, scratch_operands = 1 : i64, tpu.core_type = #tpu.core_type<tc>, window_params = [{transform_indices = @transform_0, window_bounds = array<i64: 128, 512>}, {transform_indices = @transform_1, window_bounds = array<i64: 512, 256>}, {pipeline_mode = #tpu.pipeline_mode<synchronous>, transform_indices = @transform_2, window_bounds = array<i64: 1, 256>}, {transform_indices = @transform_3, window_bounds = array<i64: 128, 256>}]} {
    %c0 = arith.constant 0 : index
    %c0_0 = arith.constant 0 : index
    %0 = vector.load %arg2[%c0, %c0_0] : memref<128x512xbf16, #tpu.memory_space<vmem>>, vector<128x512xbf16>
    %c0_1 = arith.constant 0 : index
    %c0_2 = arith.constant 0 : index
    %1 = vector.load %arg3[%c0_1, %c0_2] : memref<512x256xbf16, #tpu.memory_space<vmem>>, vector<512x256xbf16>
    %cst = arith.constant dense<0.000000e+00> : vector<128x256xf32>
    %2 = tpu.matmul %0, %1, %cst {dimension_numbers = #tpu.dot_dimension_numbers<[1], [0], [0], [1], [0, 0, 1, 1], [], []>} : vector<128x512xbf16>, vector<512x256xbf16>, vector<128x256xf32> -> vector<128x256xf32>
    %c0_i32 = arith.constant 0 : i32
    %3 = arith.cmpi eq, %arg1, %c0_i32 : i32
    %4 = arith.extui %3 : i1 to i32
    %c0_i32_3 = arith.constant 0 : i32
    %5 = arith.cmpi ne, %4, %c0_i32_3 : i32
    scf.if %5 {
      %c0_7 = arith.constant 0 : index
      %c0_8 = arith.constant 0 : index
      %12 = vector.load %arg6[%c0_7, %c0_8] : memref<128x256xf32, #tpu.memory_space<vmem>>, vector<128x256xf32>
      tpu.vector_store %arg6[%c0_7, %c0_8], %2 {strides = array<i32>} : memref<128x256xf32, #tpu.memory_space<vmem>>, vector<128x256xf32>,
    } else {
    }
    %c0_i32_4 = arith.constant 0 : i32
    %6 = arith.cmpi sgt, %arg1, %c0_i32_4 : i32
    %7 = arith.extui %6 : i1 to i32
    %c0_i32_5 = arith.constant 0 : i32
    %8 = arith.cmpi ne, %7, %c0_i32_5 : i32
    scf.if %8 {
      %c0_7 = arith.constant 0 : index
      %c0_8 = arith.constant 0 : index
      %12 = vector.load %arg6[%c0_7, %c0_8] : memref<128x256xf32, #tpu.memory_space<vmem>>, vector<128x256xf32>
      %13 = arith.addf %12, %2 : vector<128x256xf32>
      %c0_9 = arith.constant 0 : index
      %c0_10 = arith.constant 0 : index
      %14 = vector.load %arg6[%c0_9, %c0_10] : memref<128x256xf32, #tpu.memory_space<vmem>>, vector<128x256xf32>
      tpu.vector_store %arg6[%c0_9, %c0_10], %13 {strides = array<i32>} : memref<128x256xf32, #tpu.memory_space<vmem>>, vector<128x256xf32>,
    } else {
    }
    %c2_i32 = arith.constant 2 : i32
    %9 = arith.cmpi eq, %arg1, %c2_i32 : i32
    %10 = arith.extui %9 : i1 to i32
    %c0_i32_6 = arith.constant 0 : i32
    %11 = arith.cmpi ne, %10, %c0_i32_6 : i32
    scf.if %11 {
      %c0_7 = arith.constant 0 : index
      %c0_8 = arith.constant 0 : index
      %12 = vector.load %arg6[%c0_7, %c0_8] : memref<128x256xf32, #tpu.memory_space<vmem>>, vector<128x256xf32>
      %c0_9 = arith.constant 0 : index
      %c0_10 = arith.constant 0 : index
      %13 = vector.load %arg4[%c0_9, %c0_10] : memref<1x256xf32, #tpu.memory_space<vmem>>, vector<1x256xf32>
      %14 = vector.broadcast %13 : vector<1x256xf32> to vector<128x256xf32>
      %15 = arith.addf %12, %14 : vector<128x256xf32>
      %16 = arith.truncf %15 : vector<128x256xf32> to vector<128x256xbf16>
      %c0_11 = arith.constant 0 : index
      %c0_12 = arith.constant 0 : index
      %17 = vector.load %arg5[%c0_11, %c0_12] : memref<128x256xbf16, #tpu.memory_space<vmem>>, vector<128x256xbf16>
      tpu.vector_store %arg5[%c0_11, %c0_12], %16 {strides = array<i32>} : memref<128x256xbf16, #tpu.memory_space<vmem>>, vector<128x256xbf16>,
    } else {
    }
    return
  }
  func.func @transform_0(%arg0: i32, %arg1: i32) -> (i32, i32) {
    %c0_i32 = arith.constant 0 : i32
    return %arg0, %arg1 : i32, i32
  }
  func.func @transform_1(%arg0: i32, %arg1: i32) -> (i32, i32) {
    %c0_i32 = arith.constant 0 : i32
    %c0_i32_0 = arith.constant 0 : i32
    return %arg1, %c0_i32 : i32, i32
  }
  func.func @transform_2(%arg0: i32, %arg1: i32) -> (i32, i32) {
    %c0_i32 = arith.constant 0 : i32
    %c0_i32_0 = arith.constant 0 : i32
    %c0_i32_1 = arith.constant 0 : i32
    return %c0_i32, %c0_i32_0 : i32, i32
  }
  func.func @transform_3(%arg0: i32, %arg1: i32) -> (i32, i32) {
    %c0_i32 = arith.constant 0 : i32
    %c0_i32_0 = arith.constant 0 : i32
    return %arg0, %c0_i32 : i32, i32
  }
}

</mosaic_0001>

<llo_original>
// kernel: tpu_custom_call.1
$region0: #{tpu_custom_call.1}
  #allocation0 [shape = 'u32[]', space=smem, size = 0x4, offset = 0x4, fixed_abs, tag = 'smem constant byte address 0x4 - core index']
  #allocation1 [shape = 'u32[72,128]{1,0:T(1,128)}', space=vmem, size = 0x9000, scoped, tag = 'internal scratch']
  #allocation2 [shape = 'f32[128,256]{1,0:T(8,128)}', space=vmem, size = 0x20000, scoped, tag = 'scratch operand']
  %s0 = inlined_call_operand.hbm [shape: bf16[256,1536], index: 0, kind: input, shape index: {}]
  %s1 = inlined_call_operand.hbm [shape: bf16[1536,256], index: 1, kind: input, shape index: {}]
  %s2 = inlined_call_operand.hbm [shape: f32[1,256], index: 2, kind: input, shape index: {}]
  %s3 = inlined_call_operand.hbm [shape: bf16[256,256], index: 3, kind: output, shape index: {}]
  %s4 = sld [smem:[#allocation0]]
  $region69: #{tpu_custom_call.1} parent=0
    _
  %s6 = ssub.s32 1, %s4
  %s7 = scalar_select 0, %s6, %s4
  $region1: #{tpu_custom_call.1} parent=0
    #allocation3 [shape = 'u8[262144]{0}', space=vmem, size = 0x40000, scoped, tag = 'input window, operand 0']
    #allocation4 [shape = 's32[2]{0}', space=sflag, size = 0x8, scoped, tag = 'scoped memory for tpu_custom_call.1']
    #allocation5 [shape = 's32[2]{0}', space=sflag, size = 0x8, scoped, tag = 'scoped memory for tpu_custom_call.1']
    #allocation6 [shape = 'u8[524288]{0}', space=vmem, size = 0x80000, scoped, tag = 'input window, operand 1']
    #allocation7 [shape = 's32[2]{0}', space=sflag, size = 0x8, scoped, tag = 'scoped memory for tpu_custom_call.1']
    #allocation8 [shape = 'u8[1024]{0}', space=vmem, size = 0x400, scoped, tag = 'input window, operand 2, single buffered']
    #allocation9 [shape = 'u8[131072]{0}', space=vmem, size = 0x20000, scoped, tag = 'output window, operand 0']
    %8 = vsyncpa [#allocation4], 0
    %s9 = scalar_lea.sflag [#allocation4], 1
    %10 = vsyncpa %s9, 0
    %11 = vsyncpa [#allocation7], 0
    %s12 = scalar_lea.sflag [#allocation7], 1
    %13 = vsyncpa %s12, 0
    %14 = vsyncpa [#allocation5], 0
    %s15 = scalar_lea.sflag [#allocation5], 1
    %16 = vsyncpa %s15, 0
    loop: start=0, step=1, limit=8
    $region2: #{tpu_custom_call.1} parent=1 // loop_pre_header
      _
    $region3: #{tpu_custom_call.1} parent=1 // loop_header
      %s18 = sphi 0, %s22
      %p19 = scmp.ge.s32.totalorder %s18, 8
      %s25 = sphi 0, %s37
      %s26 = sphi 0, %s33
      %s27 = sphi 0, %s25
      %s28 = sphi 0, %s26
      %s29 = sphi 0, %s27
      %s30 = sphi 0, %s28
      %s42 = sphi 0, %s44
      %s45 = sphi 0, %s42
      %s46 = sphi 0, %s45
      %s62 = sphi 0, %s46
      %s68 = sphi 0, %s70
      %s71 = sphi 0, %s68
      %s72 = sphi 0, %s71
      %s88 = sphi 0, %s72
      %s92 = sphi 0, %s92
      %s94 = sphi 0, %s92
      %s95 = sphi 0, %s94
      %s109 = sphi 0, %s95
      %s115 = sphi 0, %s117
      %s118 = sphi 0, %s115
      %s119 = sphi 0, %s118
      %s135 = sphi 0, %s119
    $region4: #{tpu_custom_call.1} parent=1 // loop_header_branch
      %21 = sbr.rel (%p19) target = $region8
    $region5: #{tpu_custom_call.1} parent=1 // loop_body
      %s23 = ssub.s32 %s18, 1
      %s24 = ssub.s32 %s18, 2
      %s31 = sadd.s32 1, %s26
      %p32 = scmp.ge.s32.totalorder %s31, 3
      %s33 = scalar_select %p32, 0, %s31
      %s34 = sadd.s32 1, %s25
      %s35 = scalar_select %p32, %s34, %s25
      %p36 = scmp.ge.s32.totalorder %s35, 2
      %s37 = scalar_select %p36, 0, %s35
      %s38 = ssub.s32 %s25, %s37
      %s39 = ssub.s32 %s26, %s33
      %s40 = sor.u32 %s38, %s39
      %p41 = scmp.eq.s32.totalorder %s40, 0
      %s43 = sadd.s32 %s42, 1
      %s44 = scalar_select %p41, %s42, %s43
      %p47 = pneg %p41
      %p48 = scmp.eq.s32.totalorder %s18, 5
      %p49 = por %p47, %p48
      %p50 = scmp.ne.s32.totalorder %s42, %s45
      %p51 = scmp.eq.s32.totalorder %s18, 0
      %p52 = por %p50, %p51
      %p53 = scmp.ne.s32.totalorder %s42, %s45
      %p54 = scmp.eq.s32.totalorder %s23, 5
      %p55 = por %p53, %p54
      %p56 = scmp.ne.s32.totalorder %s45, %s46
      %p57 = scmp.eq.s32.totalorder %s23, 0
      %p58 = por %p56, %p57
      %p59 = scmp.ne.s32.totalorder %s45, %s46
      %p60 = scmp.eq.s32.totalorder %s24, 5
      %p61 = por %p59, %p60
      %p63 = scmp.ne.s32.totalorder %s46, %s62
      %p64 = scmp.eq.s32.totalorder %s24, 0
      %p65 = por %p63, %p64
      %s66 = ssub.s32 %s26, %s33
      %p67 = scmp.eq.s32.totalorder %s66, 0
      %s69 = sadd.s32 %s68, 1
      %s70 = scalar_select %p67, %s68, %s69
      %p73 = pneg %p67
      %p74 = scmp.eq.s32.totalorder %s18, 5
      %p75 = por %p73, %p74
      %p76 = scmp.ne.s32.totalorder %s68, %s71
      %p77 = scmp.eq.s32.totalorder %s18, 0
      %p78 = por %p76, %p77
      %p79 = scmp.ne.s32.totalorder %s68, %s71
      %p80 = scmp.eq.s32.totalorder %s23, 5
      %p81 = por %p79, %p80
      %p82 = scmp.ne.s32.totalorder %s71, %s72
      %p83 = scmp.eq.s32.totalorder %s23, 0
      %p84 = por %p82, %p83
      %p85 = scmp.ne.s32.totalorder %s71, %s72
      %p86 = scmp.eq.s32.totalorder %s24, 5
      %p87 = por %p85, %p86
      %p89 = scmp.ne.s32.totalorder %s72, %s88
      %p90 = scmp.eq.s32.totalorder %s24, 0
      %p91 = por %p89, %p90
      %s93 = sadd.s32 %s92, 1
      %p96 = scmp.eq.s32.totalorder %s18, 5
      %p97 = scmp.ne.s32.totalorder %s92, %s94
      %p98 = scmp.eq.s32.totalorder %s18, 0
      %p99 = por %p97, %p98
      %p100 = scmp.ne.s32.totalorder %s92, %s94
      %p101 = scmp.eq.s32.totalorder %s23, 5
      %p102 = por %p100, %p101
      %p103 = scmp.ne.s32.totalorder %s94, %s95
      %p104 = scmp.eq.s32.totalorder %s23, 0
      %p105 = por %p103, %p104
      %p106 = scmp.ne.s32.totalorder %s94, %s95
      %p107 = scmp.eq.s32.totalorder %s24, 5
      %p108 = por %p106, %p107
      %p110 = scmp.ne.s32.totalorder %s95, %s109
      %p111 = scmp.eq.s32.totalorder %s24, 0
      %p112 = por %p110, %p111
      %s113 = ssub.s32 %s25, %s37
      %p114 = scmp.eq.s32.totalorder %s113, 0
      %s116 = sadd.s32 %s115, 1
      %s117 = scalar_select %p114, %s115, %s116
      %p120 = pneg %p114
      %p121 = scmp.eq.s32.totalorder %s18, 5
      %p122 = por %p120, %p121
      %p123 = scmp.ne.s32.totalorder %s115, %s118
      %p124 = scmp.eq.s32.totalorder %s18, 0
      %p125 = por %p123, %p124
      %p126 = scmp.ne.s32.totalorder %s115, %s118
      %p127 = scmp.eq.s32.totalorder %s23, 5
      %p128 = por %p126, %p127
      %p129 = scmp.ne.s32.totalorder %s118, %s119
      %p130 = scmp.eq.s32.totalorder %s23, 0
      %p131 = por %p129, %p130
      %p132 = scmp.ne.s32.totalorder %s118, %s119
      %p133 = scmp.eq.s32.totalorder %s24, 5
      %p134 = por %p132, %p133
      %p136 = scmp.ne.s32.totalorder %s119, %s135
      %p137 = scmp.eq.s32.totalorder %s24, 0
      %p138 = por %p136, %p137
      %p139 = scmp.le.s32.totalorder 1, %s18
      %p140 = scmp.lt.s32.totalorder %s18, 7
      %p141 = pnand %p139, %p140
      %p142 = pneg %p141
      // Predicated region
      $region9: #{tpu_custom_call.1} parent=5 // pred_check
        _
      $region10: #{tpu_custom_call.1} parent=5 // pred_check_branch
        %144 = sbr.rel (%p141) target = $region12
      $region11: #{tpu_custom_call.1} parent=5 // pred_region
        %s145 = ssub.s32 %s18, 1
        // Predicated region
        $region13: #{tpu_custom_call.1} parent=11 // pred_check
          %p146 = pneg %p105
        $region14: #{tpu_custom_call.1} parent=11 // pred_check_branch
          %148 = sbr.rel (%p146) target = $region16
        $region15: #{tpu_custom_call.1} parent=11 // pred_region
          %150 = vsyncadd [#allocation7], 0
          %s152 = sshll.u32 %s2, 4
          %s153 = int_to_ptr.hbm [resolvable:$true] %s152
          %s154 = sshll.u32 [#allocation8], 4
          %s155 = int_to_ptr.vmem [resolvable:$true] %s154
          %157 = dma.hbm_to_vmem [thread:$0]  %s153, 32, %s155, [#allocation7]
        $region16: #{tpu_custom_call.1} parent=11 // pred_fallthru
          _
      $region12: #{tpu_custom_call.1} parent=5 // pred_fallthru
        _
      %p158 = scmp.lt.s32.totalorder %s18, 6
      // Predicated region
      $region17: #{tpu_custom_call.1} parent=5 // pred_check
        %p159 = pneg %p158
      $region18: #{tpu_custom_call.1} parent=5 // pred_check_branch
        %161 = sbr.rel (%p159) target = $region20
      $region19: #{tpu_custom_call.1} parent=5 // pred_region
        // Predicated region
        $region21: #{tpu_custom_call.1} parent=19 // pred_check
          %p162 = pneg %p52
        $region22: #{tpu_custom_call.1} parent=19 // pred_check_branch
          %164 = sbr.rel (%p162) target = $region24
        $region23: #{tpu_custom_call.1} parent=19 // pred_region
          %s165 = sand.u32 %s42, 1
          %s166 = scalar_lea.sflag [#allocation4], %s165
          %s167 = sand.u32 %s42, 1
          %s168 = smul.addr %s167, 256
          %s169 = scalar_lea.vmem [#allocation3], %s168
          %s170 = smul.u32 16, %s25
          %s171 = smul.u32 4, %s26
          %173 = vsyncadd %s166, 0
          %s174 = smul.addr %s170, 12
          %s175 = sadd.s32 %s171, %s174
          %s176 = smul.addr %s175, 4
          %s177 = scalar_lea.hbm %s0, %s176
          %s178 = sshll.u32 %s177, 4
          %s179 = int_to_ptr.hbm [resolvable:$true] %s178
          %s180 = sshll.u32 %s169, 4
          %s181 = int_to_ptr.vmem [resolvable:$true] %s180
          %186 = dma.hbm_to_vmem [thread:$0]  %s179, 4096, %s181, %s166, 768, 256, 16
        $region24: #{tpu_custom_call.1} parent=19 // pred_fallthru
          _
        // Predicated region
        $region25: #{tpu_custom_call.1} parent=19 // pred_check
          %p187 = pneg %p78
        $region26: #{tpu_custom_call.1} parent=19 // pred_check_branch
          %189 = sbr.rel (%p187) target = $region28
        $region27: #{tpu_custom_call.1} parent=19 // pred_region
          %s190 = sand.u32 %s18, 1
          %s191 = scalar_lea.sflag [#allocation7], %s190
          %s192 = sand.u32 %s68, 1
          %s193 = smul.addr %s192, 512
          %s194 = scalar_lea.vmem [#allocation6], %s193
          %s195 = smul.u32 64, %s26
          %197 = vsyncadd %s191, 0
          %s198 = smul.addr %s195, 2
          %s199 = smul.addr %s198, 4
          %s200 = scalar_lea.hbm %s1, %s199
          %s201 = sshll.u32 %s200, 4
          %s202 = int_to_ptr.hbm [resolvable:$true] %s201
          %s203 = sshll.u32 %s194, 4
          %s204 = int_to_ptr.vmem [resolvable:$true] %s203
          %209 = dma.hbm_to_vmem [thread:$0]  %s202, 8192, %s204, %s191, 128, 128, 8
        $region28: #{tpu_custom_call.1} parent=19 // pred_fallthru
          _
      $region20: #{tpu_custom_call.1} parent=5 // pred_fallthru
        _
      %p210 = scmp.le.s32.totalorder 1, %s18
      %p211 = scmp.lt.s32.totalorder %s18, 7
      %p212 = pnand %p210, %p211
      %p213 = pneg %p212
      // Predicated region
      $region29: #{tpu_custom_call.1} parent=5 // pred_check
        _
      $region30: #{tpu_custom_call.1} parent=5 // pred_check_branch
        %215 = sbr.rel (%p212) target = $region32
      $region31: #{tpu_custom_call.1} parent=5 // pred_region
        %s216 = ssub.s32 %s18, 1
        %s217 = sand.u32 %s45, 1
        %s218 = scalar_lea.sflag [#allocation4], %s217
        %s219 = sand.u32 %s45, 1
        %s220 = smul.addr %s219, 256
        %s221 = scalar_lea.vmem [#allocation3], %s220
        // Predicated region
        $region33: #{tpu_custom_call.1} parent=31 // pred_check
          %p222 = pneg %p58
        $region34: #{tpu_custom_call.1} parent=31 // pred_check_branch
          %224 = sbr.rel (%p222) target = $region36
        $region35: #{tpu_custom_call.1} parent=31 // pred_region
          %226 = dma.done %s218, 4096
        $region36: #{tpu_custom_call.1} parent=31 // pred_fallthru
          _
        %s227 = sand.u32 %s23, 1
        %s228 = scalar_lea.sflag [#allocation7], %s227
        %s229 = sand.u32 %s71, 1
        %s230 = smul.addr %s229, 512
        %s231 = scalar_lea.vmem [#allocation6], %s230
        // Predicated region
        $region37: #{tpu_custom_call.1} parent=31 // pred_check
          %p232 = pneg %p84
        $region38: #{tpu_custom_call.1} parent=31 // pred_check_branch
          %234 = sbr.rel (%p232) target = $region40
        $region39: #{tpu_custom_call.1} parent=31 // pred_region
          %236 = dma.done %s228, 8192
        $region40: #{tpu_custom_call.1} parent=31 // pred_fallthru
          _
        // Predicated region
        $region41: #{tpu_custom_call.1} parent=31 // pred_check
          %p237 = pneg %p105
        $region42: #{tpu_custom_call.1} parent=31 // pred_check_branch
          %239 = sbr.rel (%p237) target = $region44
        $region43: #{tpu_custom_call.1} parent=31 // pred_region
          %241 = dma.done [#allocation7], 32
        $region44: #{tpu_custom_call.1} parent=31 // pred_fallthru
          _
        %s242 = sand.u32 %s45, 1
        %s243 = scalar_lea.sflag [#allocation4], %s242
        %s244 = sand.u32 %s45, 1
        %s245 = smul.addr %s244, 256
        %s246 = scalar_lea.vmem [#allocation3], %s245
        %p247 = pneg %p58
        %p248 = pneg %p55
        %s249 = sand.u32 %s23, 1
        %s250 = scalar_lea.sflag [#allocation7], %s249
        %s251 = sand.u32 %s71, 1
        %s252 = smul.addr %s251, 512
        %s253 = scalar_lea.vmem [#allocation6], %s252
        %p254 = pneg %p84
        %p255 = pneg %p81
        %p256 = pneg %p105
        %p257 = pneg %p102
        %p258 = pneg %p131
        %p259 = pneg %p128
        %s260 = sand.u32 %s118, 1
        %s261 = scalar_lea.sflag [#allocation5], %s260
        %s262 = sand.u32 %s118, 1
        %s263 = smul.addr %s262, 128
        %s264 = scalar_lea.vmem [#allocation9], %s263
        %s265 = smul.u32 16, %s27
        %s266 = smul.u32 4, %s28
        %s267 = smul.u32 64, %s28
        %s268 = smul.u32 16, %s27
        %v269 = vld [vmem:[%s221] sm:$0xff]
        %v270 = vld [vmem:[%s221 + $0x8] sm:$0xff]
        %v271 = vld [vmem:[%s221 + $0x10] sm:$0xff]
        %v272 = vld [vmem:[%s221 + $0x18] sm:$0xff]
        %v273 = vld [vmem:[%s221 + $0x20] sm:$0xff]
        %v274 = vld [vmem:[%s221 + $0x28] sm:$0xff]
        %v275 = vld [vmem:[%s221 + $0x30] sm:$0xff]
        %v276 = vld [vmem:[%s221 + $0x38] sm:$0xff]
        %v277 = vld [vmem:[%s221 + $0x40] sm:$0xff]
        %v278 = vld [vmem:[%s221 + $0x48] sm:$0xff]
        %v279 = vld [vmem:[%s221 + $0x50] sm:$0xff]
        %v280 = vld [vmem:[%s221 + $0x58] sm:$0xff]
        %v281 = vld [vmem:[%s221 + $0x60] sm:$0xff]
        %v282 = vld [vmem:[%s221 + $0x68] sm:$0xff]
        %v283 = vld [vmem:[%s221 + $0x70] sm:$0xff]
        %v284 = vld [vmem:[%s221 + $0x78] sm:$0xff]
        %v285 = vld [vmem:[%s221 + $0x80] sm:$0xff]
        %v286 = vld [vmem:[%s221 + $0x88] sm:$0xff]
        %v287 = vld [vmem:[%s221 + $0x90] sm:$0xff]
        %v288 = vld [vmem:[%s221 + $0x98] sm:$0xff]
        %v289 = vld [vmem:[%s221 + $0xa0] sm:$0xff]
        %v290 = vld [vmem:[%s221 + $0xa8] sm:$0xff]
        %v291 = vld [vmem:[%s221 + $0xb0] sm:$0xff]
        %v292 = vld [vmem:[%s221 + $0xb8] sm:$0xff]
        %v293 = vld [vmem:[%s221 + $0xc0] sm:$0xff]
        %v294 = vld [vmem:[%s221 + $0xc8] sm:$0xff]
        %v295 = vld [vmem:[%s221 + $0xd0] sm:$0xff]
        %v296 = vld [vmem:[%s221 + $0xd8] sm:$0xff]
        %v297 = vld [vmem:[%s221 + $0xe0] sm:$0xff]
        %v298 = vld [vmem:[%s221 + $0xe8] sm:$0xff]
        %v299 = vld [vmem:[%s221 + $0xf0] sm:$0xff]
        %v300 = vld [vmem:[%s221 + $0xf8] sm:$0xff]
        %v301 = vld [vmem:[%s231] sm:$0xff]
        %v302 = vld [vmem:[%s231 + $0x8] sm:$0xff]
        %v303 = vld [vmem:[%s231 + $0x10] sm:$0xff]
        %v304 = vld [vmem:[%s231 + $0x18] sm:$0xff]
        %v305 = vld [vmem:[%s231 + $0x20] sm:$0xff]
        %v306 = vld [vmem:[%s231 + $0x28] sm:$0xff]
        %v307 = vld [vmem:[%s231 + $0x30] sm:$0xff]
        %v308 = vld [vmem:[%s231 + $0x38] sm:$0xff]
        %v309 = vld [vmem:[%s231 + $0x40] sm:$0xff]
        %v310 = vld [vmem:[%s231 + $0x48] sm:$0xff]
        %v311 = vld [vmem:[%s231 + $0x50] sm:$0xff]
        %v312 = vld [vmem:[%s231 + $0x58] sm:$0xff]
        %v313 = vld [vmem:[%s231 + $0x60] sm:$0xff]
        %v314 = vld [vmem:[%s231 + $0x68] sm:$0xff]
        %v315 = vld [vmem:[%s231 + $0x70] sm:$0xff]
        %v316 = vld [vmem:[%s231 + $0x78] sm:$0xff]
        %v317 = vld [vmem:[%s231 + $0x80] sm:$0xff]
        %v318 = vld [vmem:[%s231 + $0x88] sm:$0xff]
        %v319 = vld [vmem:[%s231 + $0x90] sm:$0xff]
        %v320 = vld [vmem:[%s231 + $0x98] sm:$0xff]
        %v321 = vld [vmem:[%s231 + $0xa0] sm:$0xff]
        %v322 = vld [vmem:[%s231 + $0xa8] sm:$0xff]
        %v323 = vld [vmem:[%s231 + $0xb0] sm:$0xff]
        %v324 = vld [vmem:[%s231 + $0xb8] sm:$0xff]
        %v325 = vld [vmem:[%s231 + $0xc0] sm:$0xff]
        %v326 = vld [vmem:[%s231 + $0xc8] sm:$0xff]
        %v327 = vld [vmem:[%s231 + $0xd0] sm:$0xff]
        %v328 = vld [vmem:[%s231 + $0xd8] sm:$0xff]
        %v329 = vld [vmem:[%s231 + $0xe0] sm:$0xff]
        %v330 = vld [vmem:[%s231 + $0xe8] sm:$0xff]
        %v331 = vld [vmem:[%s231 + $0xf0] sm:$0xff]
        %v332 = vld [vmem:[%s231 + $0xf8] sm:$0xff]
        %v333 = vld [vmem:[%s231 + $0x100] sm:$0xff]
        %v334 = vld [vmem:[%s231 + $0x108] sm:$0xff]
        %v335 = vld [vmem:[%s231 + $0x110] sm:$0xff]
        %v336 = vld [vmem:[%s231 + $0x118] sm:$0xff]
        %v337 = vld [vmem:[%s231 + $0x120] sm:$0xff]
        %v338 = vld [vmem:[%s231 + $0x128] sm:$0xff]
        %v339 = vld [vmem:[%s231 + $0x130] sm:$0xff]
        %v340 = vld [vmem:[%s231 + $0x138] sm:$0xff]
        %v341 = vld [vmem:[%s231 + $0x140] sm:$0xff]
        %v342 = vld [vmem:[%s231 + $0x148] sm:$0xff]
        %v343 = vld [vmem:[%s231 + $0x150] sm:$0xff]
        %v344 = vld [vmem:[%s231 + $0x158] sm:$0xff]
        %v345 = vld [vmem:[%s231 + $0x160] sm:$0xff]
        %v346 = vld [vmem:[%s231 + $0x168] sm:$0xff]
        %v347 = vld [vmem:[%s231 + $0x170] sm:$0xff]
        %v348 = vld [vmem:[%s231 + $0x178] sm:$0xff]
        %v349 = vld [vmem:[%s231 + $0x180] sm:$0xff]
        %v350 = vld [vmem:[%s231 + $0x188] sm:$0xff]
        %v351 = vld [vmem:[%s231 + $0x190] sm:$0xff]
        %v352 = vld [vmem:[%s231 + $0x198] sm:$0xff]
        %v353 = vld [vmem:[%s231 + $0x1a0] sm:$0xff]
        %v354 = vld [vmem:[%s231 + $0x1a8] sm:$0xff]
        %v355 = vld [vmem:[%s231 + $0x1b0] sm:$0xff]
        %v356 = vld [vmem:[%s231 + $0x1b8] sm:$0xff]
        %v357 = vld [vmem:[%s231 + $0x1c0] sm:$0xff]
        %v358 = vld [vmem:[%s231 + $0x1c8] sm:$0xff]
        %v359 = vld [vmem:[%s231 + $0x1d0] sm:$0xff]
        %v360 = vld [vmem:[%s231 + $0x1d8] sm:$0xff]
        %v361 = vld [vmem:[%s231 + $0x1e0] sm:$0xff]
        %v362 = vld [vmem:[%s231 + $0x1e8] sm:$0xff]
        %v363 = vld [vmem:[%s231 + $0x1f0] sm:$0xff]
        %v364 = vld [vmem:[%s231 + $0x1f8] sm:$0xff]
        %v397 = vunpack.c.l.b16 %v269
        %v398 = vunpack.c.h.b16 %v269
        %v399 = vunpack.c.l.b16 %v270
        %v400 = vunpack.c.h.b16 %v270
        %v401 = vunpack.c.l.b16 %v271
        %v402 = vunpack.c.h.b16 %v271
        %v403 = vunpack.c.l.b16 %v272
        %v404 = vunpack.c.h.b16 %v272
        %v405 = vunpack.c.l.b16 %v273
        %v406 = vunpack.c.h.b16 %v273
        %v407 = vunpack.c.l.b16 %v274
        %v408 = vunpack.c.h.b16 %v274
        %v409 = vunpack.c.l.b16 %v275
        %v410 = vunpack.c.h.b16 %v275
        %v411 = vunpack.c.l.b16 %v276
        %v412 = vunpack.c.h.b16 %v276
        %v413 = vunpack.c.l.b16 %v277
        %v414 = vunpack.c.h.b16 %v277
        %v415 = vunpack.c.l.b16 %v278
        %v416 = vunpack.c.h.b16 %v278
        %v417 = vunpack.c.l.b16 %v279
        %v418 = vunpack.c.h.b16 %v279
        %v419 = vunpack.c.l.b16 %v280
        %v420 = vunpack.c.h.b16 %v280
        %v421 = vunpack.c.l.b16 %v281
        %v422 = vunpack.c.h.b16 %v281
        %v423 = vunpack.c.l.b16 %v282
        %v424 = vunpack.c.h.b16 %v282
        %v425 = vunpack.c.l.b16 %v283
        %v426 = vunpack.c.h.b16 %v283
        %v427 = vunpack.c.l.b16 %v284
        %v428 = vunpack.c.h.b16 %v284
        %v429 = vunpack.c.l.b16 %v285
        %v430 = vunpack.c.h.b16 %v285
        %v431 = vunpack.c.l.b16 %v286
        %v432 = vunpack.c.h.b16 %v286
        %v433 = vunpack.c.l.b16 %v287
        %v434 = vunpack.c.h.b16 %v287
        %v435 = vunpack.c.l.b16 %v288
        %v436 = vunpack.c.h.b16 %v288
        %v437 = vunpack.c.l.b16 %v289
        %v438 = vunpack.c.h.b16 %v289
        %v439 = vunpack.c.l.b16 %v290
        %v440 = vunpack.c.h.b16 %v290
        %v441 = vunpack.c.l.b16 %v291
        %v442 = vunpack.c.h.b16 %v291
        %v443 = vunpack.c.l.b16 %v292
        %v444 = vunpack.c.h.b16 %v292
        %v445 = vunpack.c.l.b16 %v293
        %v446 = vunpack.c.h.b16 %v293
        %v447 = vunpack.c.l.b16 %v294
        %v448 = vunpack.c.h.b16 %v294
        %v449 = vunpack.c.l.b16 %v295
        %v450 = vunpack.c.h.b16 %v295
        %v451 = vunpack.c.l.b16 %v296
        %v452 = vunpack.c.h.b16 %v296
        %v453 = vunpack.c.l.b16 %v297
        %v454 = vunpack.c.h.b16 %v297
        %v455 = vunpack.c.l.b16 %v298
        %v456 = vunpack.c.h.b16 %v298
        %v457 = vunpack.c.l.b16 %v299
        %v458 = vunpack.c.h.b16 %v299
        %v459 = vunpack.c.l.b16 %v300
        %v460 = vunpack.c.h.b16 %v300
        %v461 = vpack.c.b16 %v401, %v397
        %v462 = vpack.c.b16 %v402, %v398
        %v463 = vpack.c.b16 %v403, %v399
        %v464 = vpack.c.b16 %v404, %v400
        %v465 = vpack.c.b16 %v409, %v405
        %v466 = vpack.c.b16 %v410, %v406
        %v467 = vpack.c.b16 %v411, %v407
        %v468 = vpack.c.b16 %v412, %v408
        %v469 = vpack.c.b16 %v417, %v413
        %v470 = vpack.c.b16 %v418, %v414
        %v471 = vpack.c.b16 %v419, %v415
        %v472 = vpack.c.b16 %v420, %v416
        %v473 = vpack.c.b16 %v425, %v421
        %v474 = vpack.c.b16 %v426, %v422
        %v475 = vpack.c.b16 %v427, %v423
        %v476 = vpack.c.b16 %v428, %v424
        %v477 = vpack.c.b16 %v433, %v429
        %v478 = vpack.c.b16 %v434, %v430
        %v479 = vpack.c.b16 %v435, %v431
        %v480 = vpack.c.b16 %v436, %v432
        %v481 = vpack.c.b16 %v441, %v437
        %v482 = vpack.c.b16 %v442, %v438
        %v483 = vpack.c.b16 %v443, %v439
        %v484 = vpack.c.b16 %v444, %v440
        %v485 = vpack.c.b16 %v449, %v445
        %v486 = vpack.c.b16 %v450, %v446
        %v487 = vpack.c.b16 %v451, %v447
        %v488 = vpack.c.b16 %v452, %v448
        %v489 = vpack.c.b16 %v457, %v453
        %v490 = vpack.c.b16 %v458, %v454
        %v491 = vpack.c.b16 %v459, %v455
        %v492 = vpack.c.b16 %v460, %v456
        %v589 = vunpack.c.l.b16 %v301
        %v590 = vunpack.c.h.b16 %v301
        %v591 = vunpack.c.l.b16 %v302
        %v592 = vunpack.c.h.b16 %v302
        %v593 = vunpack.c.l.b16 %v303
        %v594 = vunpack.c.h.b16 %v303
        %v595 = vunpack.c.l.b16 %v304
        %v596 = vunpack.c.h.b16 %v304
        %v597 = vunpack.c.l.b16 %v305
        %v598 = vunpack.c.h.b16 %v305
        %v599 = vunpack.c.l.b16 %v306
        %v600 = vunpack.c.h.b16 %v306
        %v601 = vunpack.c.l.b16 %v307
        %v602 = vunpack.c.h.b16 %v307
        %v603 = vunpack.c.l.b16 %v308
        %v604 = vunpack.c.h.b16 %v308
        %v605 = vunpack.c.l.b16 %v309
        %v606 = vunpack.c.h.b16 %v309
        %v607 = vunpack.c.l.b16 %v310
        %v608 = vunpack.c.h.b16 %v310
        %v609 = vunpack.c.l.b16 %v311
        %v610 = vunpack.c.h.b16 %v311
        %v611 = vunpack.c.l.b16 %v312
        %v612 = vunpack.c.h.b16 %v312
        %v613 = vunpack.c.l.b16 %v313
        %v614 = vunpack.c.h.b16 %v313
        %v615 = vunpack.c.l.b16 %v314
        %v616 = vunpack.c.h.b16 %v314
        %v617 = vunpack.c.l.b16 %v315
        %v618 = vunpack.c.h.b16 %v315
        %v619 = vunpack.c.l.b16 %v316
        %v620 = vunpack.c.h.b16 %v316
        %v621 = vunpack.c.l.b16 %v317
        %v622 = vunpack.c.h.b16 %v317
        %v623 = vunpack.c.l.b16 %v318
        %v624 = vunpack.c.h.b16 %v318
        %v625 = vunpack.c.l.b16 %v319
        %v626 = vunpack.c.h.b16 %v319
        %v627 = vunpack.c.l.b16 %v320
        %v628 = vunpack.c.h.b16 %v320
        %v629 = vunpack.c.l.b16 %v321
        %v630 = vunpack.c.h.b16 %v321
        %v631 = vunpack.c.l.b16 %v322
        %v632 = vunpack.c.h.b16 %v322
        %v633 = vunpack.c.l.b16 %v323
        %v634 = vunpack.c.h.b16 %v323
        %v635 = vunpack.c.l.b16 %v324
        %v636 = vunpack.c.h.b16 %v324
        %v637 = vunpack.c.l.b16 %v325
        %v638 = vunpack.c.h.b16 %v325
        %v639 = vunpack.c.l.b16 %v326
        %v640 = vunpack.c.h.b16 %v326
        %v641 = vunpack.c.l.b16 %v327
        %v642 = vunpack.c.h.b16 %v327
        %v643 = vunpack.c.l.b16 %v328
        %v644 = vunpack.c.h.b16 %v328
        %v645 = vunpack.c.l.b16 %v329
        %v646 = vunpack.c.h.b16 %v329
        %v647 = vunpack.c.l.b16 %v330
        %v648 = vunpack.c.h.b16 %v330
        %v649 = vunpack.c.l.b16 %v331
        %v650 = vunpack.c.h.b16 %v331
        %v651 = vunpack.c.l.b16 %v332
        %v652 = vunpack.c.h.b16 %v332
        %v653 = vunpack.c.l.b16 %v333
        %v654 = vunpack.c.h.b16 %v333
        %v655 = vunpack.c.l.b16 %v334
        %v656 = vunpack.c.h.b16 %v334
        %v657 = vunpack.c.l.b16 %v335
        %v658 = vunpack.c.h.b16 %v335
        %v659 = vunpack.c.l.b16 %v336
        %v660 = vunpack.c.h.b16 %v336
        %v661 = vunpack.c.l.b16 %v337
        %v662 = vunpack.c.h.b16 %v337
        %v663 = vunpack.c.l.b16 %v338
        %v664 = vunpack.c.h.b16 %v338
        %v665 = vunpack.c.l.b16 %v339
        %v666 = vunpack.c.h.b16 %v339
        %v667 = vunpack.c.l.b16 %v340
        %v668 = vunpack.c.h.b16 %v340
        %v669 = vunpack.c.l.b16 %v341
        %v670 = vunpack.c.h.b16 %v341
        %v671 = vunpack.c.l.b16 %v342
        %v672 = vunpack.c.h.b16 %v342
        %v673 = vunpack.c.l.b16 %v343
        %v674 = vunpack.c.h.b16 %v343
        %v675 = vunpack.c.l.b16 %v344
        %v676 = vunpack.c.h.b16 %v344
        %v677 = vunpack.c.l.b16 %v345
        %v678 = vunpack.c.h.b16 %v345
        %v679 = vunpack.c.l.b16 %v346
        %v680 = vunpack.c.h.b16 %v346
        %v681 = vunpack.c.l.b16 %v347
        %v682 = vunpack.c.h.b16 %v347
        %v683 = vunpack.c.l.b16 %v348
        %v684 = vunpack.c.h.b16 %v348
        %v685 = vunpack.c.l.b16 %v349
        %v686 = vunpack.c.h.b16 %v349
        %v687 = vunpack.c.l.b16 %v350
        %v688 = vunpack.c.h.b16 %v350
        %v689 = vunpack.c.l.b16 %v351
        %v690 = vunpack.c.h.b16 %v351
        %v691 = vunpack.c.l.b16 %v352
        %v692 = vunpack.c.h.b16 %v352
        %v693 = vunpack.c.l.b16 %v353
        %v694 = vunpack.c.h.b16 %v353
        %v695 = vunpack.c.l.b16 %v354
        %v696 = vunpack.c.h.b16 %v354
        %v697 = vunpack.c.l.b16 %v355
        %v698 = vunpack.c.h.b16 %v355
        %v699 = vunpack.c.l.b16 %v356
        %v700 = vunpack.c.h.b16 %v356
        %v701 = vunpack.c.l.b16 %v357
        %v702 = vunpack.c.h.b16 %v357
        %v703 = vunpack.c.l.b16 %v358
        %v704 = vunpack.c.h.b16 %v358
        %v705 = vunpack.c.l.b16 %v359
        %v706 = vunpack.c.h.b16 %v359
        %v707 = vunpack.c.l.b16 %v360
        %v708 = vunpack.c.h.b16 %v360
        %v709 = vunpack.c.l.b16 %v361
        %v710 = vunpack.c.h.b16 %v361
        %v711 = vunpack.c.l.b16 %v362
        %v712 = vunpack.c.h.b16 %v362
        %v713 = vunpack.c.l.b16 %v363
        %v714 = vunpack.c.h.b16 %v363
        %v715 = vunpack.c.l.b16 %v364
        %v716 = vunpack.c.h.b16 %v364
        %v717 = vpack.c.b16 %v591, %v589
        %v718 = vpack.c.b16 %v592, %v590
        %v719 = vpack.c.b16 %v595, %v593
        %v720 = vpack.c.b16 %v596, %v594
        %v721 = vpack.c.b16 %v599, %v597
        %v722 = vpack.c.b16 %v600, %v598
        %v723 = vpack.c.b16 %v603, %v601
        %v724 = vpack.c.b16 %v604, %v602
        %v725 = vpack.c.b16 %v607, %v605
        %v726 = vpack.c.b16 %v608, %v606
        %v727 = vpack.c.b16 %v611, %v609
        %v728 = vpack.c.b16 %v612, %v610
        %v729 = vpack.c.b16 %v615, %v613
        %v730 = vpack.c.b16 %v616, %v614
        %v731 = vpack.c.b16 %v619, %v617
        %v732 = vpack.c.b16 %v620, %v618
        %v733 = vpack.c.b16 %v623, %v621
        %v734 = vpack.c.b16 %v624, %v622
        %v735 = vpack.c.b16 %v627, %v625
        %v736 = vpack.c.b16 %v628, %v626
        %v737 = vpack.c.b16 %v631, %v629
        %v738 = vpack.c.b16 %v632, %v630
        %v739 = vpack.c.b16 %v635, %v633
        %v740 = vpack.c.b16 %v636, %v634
        %v741 = vpack.c.b16 %v639, %v637
        %v742 = vpack.c.b16 %v640, %v638
        %v743 = vpack.c.b16 %v643, %v641
        %v744 = vpack.c.b16 %v644, %v642
        %v745 = vpack.c.b16 %v647, %v645
        %v746 = vpack.c.b16 %v648, %v646
        %v747 = vpack.c.b16 %v651, %v649
        %v748 = vpack.c.b16 %v652, %v650
        %v749 = vpack.c.b16 %v655, %v653
        %v750 = vpack.c.b16 %v656, %v654
        %v751 = vpack.c.b16 %v659, %v657
        %v752 = vpack.c.b16 %v660, %v658
        %v753 = vpack.c.b16 %v663, %v661
        %v754 = vpack.c.b16 %v664, %v662
        %v755 = vpack.c.b16 %v667, %v665
        %v756 = vpack.c.b16 %v668, %v666
        %v757 = vpack.c.b16 %v671, %v669
        %v758 = vpack.c.b16 %v672, %v670
        %v759 = vpack.c.b16 %v675, %v673
        %v760 = vpack.c.b16 %v676, %v674
        %v761 = vpack.c.b16 %v679, %v677
        %v762 = vpack.c.b16 %v680, %v678
        %v763 = vpack.c.b16 %v683, %v681
        %v764 = vpack.c.b16 %v684, %v682
        %v765 = vpack.c.b16 %v687, %v685
        %v766 = vpack.c.b16 %v688, %v686
        %v767 = vpack.c.b16 %v691, %v689
        %v768 = vpack.c.b16 %v692, %v690
        %v769 = vpack.c.b16 %v695, %v693
        %v770 = vpack.c.b16 %v696, %v694
        %v771 = vpack.c.b16 %v699, %v697
        %v772 = vpack.c.b16 %v700, %v698
        %v773 = vpack.c.b16 %v703, %v701
        %v774 = vpack.c.b16 %v704, %v702
        %v775 = vpack.c.b16 %v707, %v705
        %v776 = vpack.c.b16 %v708, %v706
        %v777 = vpack.c.b16 %v711, %v709
        %v778 = vpack.c.b16 %v712, %v710
        %v779 = vpack.c.b16 %v715, %v713
        %v780 = vpack.c.b16 %v716, %v714
        %845 = vmatpush.bf16.msra.mxu0 %v731
        %846 = vmatpush.bf16.msra.mxu0 %v729
        %847 = vmatpush.bf16.msra.mxu0 %v727
        %848 = vmatpush.bf16.msra.mxu0 %v725
        %849 = vmatpush.bf16.msra.mxu0 %v723
        %850 = vmatpush.bf16.msra.mxu0 %v721
        %851 = vmatpush.bf16.msra.mxu0 %v719
        %852 = vmatpush.bf16.msra.mxu0 %v717
        %853 = vmatmul.bf16.gmra.mxu0 %v461
        %v854 = vpop.f32.mrf.mxu0
        %v855 = vadd.f32 0.0, %v854
        %v856 = vpop.f32.mrf.mxu0
        %v857 = vadd.f32 0.0, %v856
        %858 = vmatmul.bf16.gmra.mxu0 %v465
        %v859 = vpop.f32.mrf.mxu0
        %v860 = vadd.f32 0.0, %v859
        %v861 = vpop.f32.mrf.mxu0
        %v862 = vadd.f32 0.0, %v861
        %863 = vmatmul.bf16.gmra.mxu0 %v469
        %v864 = vpop.f32.mrf.mxu0
        %v865 = vadd.f32 0.0, %v864
        %v866 = vpop.f32.mrf.mxu0
        %v867 = vadd.f32 0.0, %v866
        %868 = vmatmul.bf16.gmra.mxu0 %v473
        %v869 = vpop.f32.mrf.mxu0
        %v870 = vadd.f32 0.0, %v869
        %v871 = vpop.f32.mrf.mxu0
        %v872 = vadd.f32 0.0, %v871
        %873 = vmatmul.bf16.gmra.mxu0 %v477
        %v874 = vpop.f32.mrf.mxu0
        %v875 = vadd.f32 0.0, %v874
        %v876 = vpop.f32.mrf.mxu0
        %v877 = vadd.f32 0.0, %v876
        %878 = vmatmul.bf16.gmra.mxu0 %v481
        %v879 = vpop.f32.mrf.mxu0
        %v880 = vadd.f32 0.0, %v879
        %v881 = vpop.f32.mrf.mxu0
        %v882 = vadd.f32 0.0, %v881
        %883 = vmatmul.bf16.gmra.mxu0 %v485
        %v884 = vpop.f32.mrf.mxu0
        %v885 = vadd.f32 0.0, %v884
        %v886 = vpop.f32.mrf.mxu0
        %v887 = vadd.f32 0.0, %v886
        %888 = vmatmul.bf16.gmra.mxu0 %v489
        %v889 = vpop.f32.mrf.mxu0
        %v890 = vadd.f32 0.0, %v889
        %v891 = vpop.f32.mrf.mxu0
        %v892 = vadd.f32 0.0, %v891
        %893 = vdwg.mxu0
        %894 = vmatpush.bf16.msra.mxu0 %v747
        %895 = vmatpush.bf16.msra.mxu0 %v745
        %896 = vmatpush.bf16.msra.mxu0 %v743
        %897 = vmatpush.bf16.msra.mxu0 %v741
        %898 = vmatpush.bf16.msra.mxu0 %v739
        %899 = vmatpush.bf16.msra.mxu0 %v737
        %900 = vmatpush.bf16.msra.mxu0 %v735
        %901 = vmatpush.bf16.msra.mxu0 %v733
        %902 = vmatmul.bf16.gmra.mxu0 %v462
        %v903 = vpop.f32.mrf.mxu0
        %v904 = vadd.f32 %v855, %v903
        %v905 = vpop.f32.mrf.mxu0
        %v906 = vadd.f32 %v857, %v905
        %907 = vmatmul.bf16.gmra.mxu0 %v466
        %v908 = vpop.f32.mrf.mxu0
        %v909 = vadd.f32 %v860, %v908
        %v910 = vpop.f32.mrf.mxu0
        %v911 = vadd.f32 %v862, %v910
        %912 = vmatmul.bf16.gmra.mxu0 %v470
        %v913 = vpop.f32.mrf.mxu0
        %v914 = vadd.f32 %v865, %v913
        %v915 = vpop.f32.mrf.mxu0
        %v916 = vadd.f32 %v867, %v915
        %917 = vmatmul.bf16.gmra.mxu0 %v474
        %v918 = vpop.f32.mrf.mxu0
        %v919 = vadd.f32 %v870, %v918
        %v920 = vpop.f32.mrf.mxu0
        %v921 = vadd.f32 %v872, %v920
        %922 = vmatmul.bf16.gmra.mxu0 %v478
        %v923 = vpop.f32.mrf.mxu0
        %v924 = vadd.f32 %v875, %v923
        %v925 = vpop.f32.mrf.mxu0
        %v926 = vadd.f32 %v877, %v925
        %927 = vmatmul.bf16.gmra.mxu0 %v482
        %v928 = vpop.f32.mrf.mxu0
        %v929 = vadd.f32 %v880, %v928
        %v930 = vpop.f32.mrf.mxu0
        %v931 = vadd.f32 %v882, %v930
        %932 = vmatmul.bf16.gmra.mxu0 %v486
        %v933 = vpop.f32.mrf.mxu0
        %v934 = vadd.f32 %v885, %v933
        %v935 = vpop.f32.mrf.mxu0
        %v936 = vadd.f32 %v887, %v935
        %937 = vmatmul.bf16.gmra.mxu0 %v490
        %v938 = vpop.f32.mrf.mxu0
        %v939 = vadd.f32 %v890, %v938
        %v940 = vpop.f32.mrf.mxu0
        %v941 = vadd.f32 %v892, %v940
        %942 = vdwg.mxu0
        %943 = vmatpush.bf16.msra.mxu0 %v763
        %944 = vmatpush.bf16.msra.mxu0 %v761
        %945 = vmatpush.bf16.msra.mxu0 %v759
        %946 = vmatpush.bf16.msra.mxu0 %v757
        %947 = vmatpush.bf16.msra.mxu0 %v755
        %948 = vmatpush.bf16.msra.mxu0 %v753
        %949 = vmatpush.bf16.msra.mxu0 %v751
        %950 = vmatpush.bf16.msra.mxu0 %v749
        %951 = vmatmul.bf16.gmra.mxu0 %v463
        %v952 = vpop.f32.mrf.mxu0
        %v953 = vadd.f32 %v904, %v952
        %v954 = vpop.f32.mrf.mxu0
        %v955 = vadd.f32 %v906, %v954
        %956 = vmatmul.bf16.gmra.mxu0 %v467
        %v957 = vpop.f32.mrf.mxu0
        %v958 = vadd.f32 %v909, %v957
        %v959 = vpop.f32.mrf.mxu0
        %v960 = vadd.f32 %v911, %v959
        %961 = vmatmul.bf16.gmra.mxu0 %v471
        %v962 = vpop.f32.mrf.mxu0
        %v963 = vadd.f32 %v914, %v962
        %v964 = vpop.f32.mrf.mxu0
        %v965 = vadd.f32 %v916, %v964
        %966 = vmatmul.bf16.gmra.mxu0 %v475
        %v967 = vpop.f32.mrf.mxu0
        %v968 = vadd.f32 %v919, %v967
        %v969 = vpop.f32.mrf.mxu0
        %v970 = vadd.f32 %v921, %v969
        %971 = vmatmul.bf16.gmra.mxu0 %v479
        %v972 = vpop.f32.mrf.mxu0
        %v973 = vadd.f32 %v924, %v972
        %v974 = vpop.f32.mrf.mxu0
        %v975 = vadd.f32 %v926, %v974
        %976 = vmatmul.bf16.gmra.mxu0 %v483
        %v977 = vpop.f32.mrf.mxu0
        %v978 = vadd.f32 %v929, %v977
        %v979 = vpop.f32.mrf.mxu0
        %v980 = vadd.f32 %v931, %v979
        %981 = vmatmul.bf16.gmra.mxu0 %v487
        %v982 = vpop.f32.mrf.mxu0
        %v983 = vadd.f32 %v934, %v982
        %v984 = vpop.f32.mrf.mxu0
        %v985 = vadd.f32 %v936, %v984
        %986 = vmatmul.bf16.gmra.mxu0 %v491
        %v987 = vpop.f32.mrf.mxu0
        %v988 = vadd.f32 %v939, %v987
        %v989 = vpop.f32.mrf.mxu0
        %v990 = vadd.f32 %v941, %v989
        %991 = vdwg.mxu0
        %992 = vmatpush.bf16.msra.mxu0 %v779
        %993 = vmatpush.bf16.msra.mxu0 %v777
        %994 = vmatpush.bf16.msra.mxu0 %v775
        %995 = vmatpush.bf16.msra.mxu0 %v773
        %996 = vmatpush.bf16.msra.mxu0 %v771
        %997 = vmatpush.bf16.msra.mxu0 %v769
        %998 = vmatpush.bf16.msra.mxu0 %v767
        %999 = vmatpush.bf16.msra.mxu0 %v765
        %1000 = vmatmul.bf16.gmra.mxu0 %v464
        %v1001 = vpop.f32.mrf.mxu0
        %v1002 = vadd.f32 %v953, %v1001
        %v1003 = vpop.f32.mrf.mxu0
        %v1004 = vadd.f32 %v955, %v1003
        %1005 = vmatmul.bf16.gmra.mxu0 %v468
        %v1006 = vpop.f32.mrf.mxu0
        %v1007 = vadd.f32 %v958, %v1006
        %v1008 = vpop.f32.mrf.mxu0
        %v1009 = vadd.f32 %v960, %v1008
        %1010 = vmatmul.bf16.gmra.mxu0 %v472
        %v1011 = vpop.f32.mrf.mxu0
        %v1012 = vadd.f32 %v963, %v1011
        %v1013 = vpop.f32.mrf.mxu0
        %v1014 = vadd.f32 %v965, %v1013
        %1015 = vmatmul.bf16.gmra.mxu0 %v476
        %v1016 = vpop.f32.mrf.mxu0
        %v1017 = vadd.f32 %v968, %v1016
        %v1018 = vpop.f32.mrf.mxu0
        %v1019 = vadd.f32 %v970, %v1018
        %1020 = vmatmul.bf16.gmra.mxu0 %v480
        %v1021 = vpop.f32.mrf.mxu0
        %v1022 = vadd.f32 %v973, %v1021
        %v1023 = vpop.f32.mrf.mxu0
        %v1024 = vadd.f32 %v975, %v1023
        %1025 = vmatmul.bf16.gmra.mxu0 %v484
        %v1026 = vpop.f32.mrf.mxu0
        %v1027 = vadd.f32 %v978, %v1026
        %v1028 = vpop.f32.mrf.mxu0
        %v1029 = vadd.f32 %v980, %v1028
        %1030 = vmatmul.bf16.gmra.mxu0 %v488
        %v1031 = vpop.f32.mrf.mxu0
        %v1032 = vadd.f32 %v983, %v1031
        %v1033 = vpop.f32.mrf.mxu0
        %v1034 = vadd.f32 %v985, %v1033
        %1035 = vmatmul.bf16.gmra.mxu0 %v492
        %v1036 = vpop.f32.mrf.mxu0
        %v1037 = vadd.f32 %v988, %v1036
        %v1038 = vpop.f32.mrf.mxu0
        %v1039 = vadd.f32 %v990, %v1038
        %1040 = vdwg.mxu0
        %1041 = vmatpush.bf16.msra.mxu0 %v732
        %1042 = vmatpush.bf16.msra.mxu0 %v730
        %1043 = vmatpush.bf16.msra.mxu0 %v728
        %1044 = vmatpush.bf16.msra.mxu0 %v726
        %1045 = vmatpush.bf16.msra.mxu0 %v724
        %1046 = vmatpush.bf16.msra.mxu0 %v722
        %1047 = vmatpush.bf16.msra.mxu0 %v720
        %1048 = vmatpush.bf16.msra.mxu0 %v718
        %1049 = vmatmul.bf16.gmra.mxu0 %v461
        %v1050 = vpop.f32.mrf.mxu0
        %v1051 = vadd.f32 0.0, %v1050
        %v1052 = vpop.f32.mrf.mxu0
        %v1053 = vadd.f32 0.0, %v1052
        %1054 = vmatmul.bf16.gmra.mxu0 %v465
        %v1055 = vpop.f32.mrf.mxu0
        %v1056 = vadd.f32 0.0, %v1055
        %v1057 = vpop.f32.mrf.mxu0
        %v1058 = vadd.f32 0.0, %v1057
        %1059 = vmatmul.bf16.gmra.mxu0 %v469
        %v1060 = vpop.f32.mrf.mxu0
        %v1061 = vadd.f32 0.0, %v1060
        %v1062 = vpop.f32.mrf.mxu0
        %v1063 = vadd.f32 0.0, %v1062
        %1064 = vmatmul.bf16.gmra.mxu0 %v473
        %v1065 = vpop.f32.mrf.mxu0
        %v1066 = vadd.f32 0.0, %v1065
        %v1067 = vpop.f32.mrf.mxu0
        %v1068 = vadd.f32 0.0, %v1067
        %1069 = vmatmul.bf16.gmra.mxu0 %v477
        %v1070 = vpop.f32.mrf.mxu0
        %v1071 = vadd.f32 0.0, %v1070
        %v1072 = vpop.f32.mrf.mxu0
        %v1073 = vadd.f32 0.0, %v1072
        %1074 = vmatmul.bf16.gmra.mxu0 %v481
        %v1075 = vpop.f32.mrf.mxu0
        %v1076 = vadd.f32 0.0, %v1075
        %v1077 = vpop.f32.mrf.mxu0
        %v1078 = vadd.f32 0.0, %v1077
        %1079 = vmatmul.bf16.gmra.mxu0 %v485
        %v1080 = vpop.f32.mrf.mxu0
        %v1081 = vadd.f32 0.0, %v1080
        %v1082 = vpop.f32.mrf.mxu0
        %v1083 = vadd.f32 0.0, %v1082
        %1084 = vmatmul.bf16.gmra.mxu0 %v489
        %v1085 = vpop.f32.mrf.mxu0
        %v1086 = vadd.f32 0.0, %v1085
        %v1087 = vpop.f32.mrf.mxu0
        %v1088 = vadd.f32 0.0, %v1087
        %1089 = vdwg.mxu0
        %1090 = vmatpush.bf16.msra.mxu0 %v748
        %1091 = vmatpush.bf16.msra.mxu0 %v746
        %1092 = vmatpush.bf16.msra.mxu0 %v744
        %1093 = vmatpush.bf16.msra.mxu0 %v742
        %1094 = vmatpush.bf16.msra.mxu0 %v740
        %1095 = vmatpush.bf16.msra.mxu0 %v738
        %1096 = vmatpush.bf16.msra.mxu0 %v736
        %1097 = vmatpush.bf16.msra.mxu0 %v734
        %1098 = vmatmul.bf16.gmra.mxu0 %v462
        %v1099 = vpop.f32.mrf.mxu0
        %v1100 = vadd.f32 %v1051, %v1099
        %v1101 = vpop.f32.mrf.mxu0
        %v1102 = vadd.f32 %v1053, %v1101
        %1103 = vmatmul.bf16.gmra.mxu0 %v466
        %v1104 = vpop.f32.mrf.mxu0
        %v1105 = vadd.f32 %v1056, %v1104
        %v1106 = vpop.f32.mrf.mxu0
        %v1107 = vadd.f32 %v1058, %v1106
        %1108 = vmatmul.bf16.gmra.mxu0 %v470
        %v1109 = vpop.f32.mrf.mxu0
        %v1110 = vadd.f32 %v1061, %v1109
        %v1111 = vpop.f32.mrf.mxu0
        %v1112 = vadd.f32 %v1063, %v1111
        %1113 = vmatmul.bf16.gmra.mxu0 %v474
        %v1114 = vpop.f32.mrf.mxu0
        %v1115 = vadd.f32 %v1066, %v1114
        %v1116 = vpop.f32.mrf.mxu0
        %v1117 = vadd.f32 %v1068, %v1116
        %1118 = vmatmul.bf16.gmra.mxu0 %v478
        %v1119 = vpop.f32.mrf.mxu0
        %v1120 = vadd.f32 %v1071, %v1119
        %v1121 = vpop.f32.mrf.mxu0
        %v1122 = vadd.f32 %v1073, %v1121
        %1123 = vmatmul.bf16.gmra.mxu0 %v482
        %v1124 = vpop.f32.mrf.mxu0
        %v1125 = vadd.f32 %v1076, %v1124
        %v1126 = vpop.f32.mrf.mxu0
        %v1127 = vadd.f32 %v1078, %v1126
        %1128 = vmatmul.bf16.gmra.mxu0 %v486
        %v1129 = vpop.f32.mrf.mxu0
        %v1130 = vadd.f32 %v1081, %v1129
        %v1131 = vpop.f32.mrf.mxu0
        %v1132 = vadd.f32 %v1083, %v1131
        %1133 = vmatmul.bf16.gmra.mxu0 %v490
        %v1134 = vpop.f32.mrf.mxu0
        %v1135 = vadd.f32 %v1086, %v1134
        %v1136 = vpop.f32.mrf.mxu0
        %v1137 = vadd.f32 %v1088, %v1136
        %1138 = vdwg.mxu0
        %1139 = vmatpush.bf16.msra.mxu0 %v764
        %1140 = vmatpush.bf16.msra.mxu0 %v762
        %1141 = vmatpush.bf16.msra.mxu0 %v760
        %1142 = vmatpush.bf16.msra.mxu0 %v758
        %1143 = vmatpush.bf16.msra.mxu0 %v756
        %1144 = vmatpush.bf16.msra.mxu0 %v754
        %1145 = vmatpush.bf16.msra.mxu0 %v752
        %1146 = vmatpush.bf16.msra.mxu0 %v750
        %1147 = vmatmul.bf16.gmra.mxu0 %v463
        %v1148 = vpop.f32.mrf.mxu0
        %v1149 = vadd.f32 %v1100, %v1148
        %v1150 = vpop.f32.mrf.mxu0
        %v1151 = vadd.f32 %v1102, %v1150
        %1152 = vmatmul.bf16.gmra.mxu0 %v467
        %v1153 = vpop.f32.mrf.mxu0
        %v1154 = vadd.f32 %v1105, %v1153
        %v1155 = vpop.f32.mrf.mxu0
        %v1156 = vadd.f32 %v1107, %v1155
        %1157 = vmatmul.bf16.gmra.mxu0 %v471
        %v1158 = vpop.f32.mrf.mxu0
        %v1159 = vadd.f32 %v1110, %v1158
        %v1160 = vpop.f32.mrf.mxu0
        %v1161 = vadd.f32 %v1112, %v1160
        %1162 = vmatmul.bf16.gmra.mxu0 %v475
        %v1163 = vpop.f32.mrf.mxu0
        %v1164 = vadd.f32 %v1115, %v1163
        %v1165 = vpop.f32.mrf.mxu0
        %v1166 = vadd.f32 %v1117, %v1165
        %1167 = vmatmul.bf16.gmra.mxu0 %v479
        %v1168 = vpop.f32.mrf.mxu0
        %v1169 = vadd.f32 %v1120, %v1168
        %v1170 = vpop.f32.mrf.mxu0
        %v1171 = vadd.f32 %v1122, %v1170
        %1172 = vmatmul.bf16.gmra.mxu0 %v483
        %v1173 = vpop.f32.mrf.mxu0
        %v1174 = vadd.f32 %v1125, %v1173
        %v1175 = vpop.f32.mrf.mxu0
        %v1176 = vadd.f32 %v1127, %v1175
        %1177 = vmatmul.bf16.gmra.mxu0 %v487
        %v1178 = vpop.f32.mrf.mxu0
        %v1179 = vadd.f32 %v1130, %v1178
        %v1180 = vpop.f32.mrf.mxu0
        %v1181 = vadd.f32 %v1132, %v1180
        %1182 = vmatmul.bf16.gmra.mxu0 %v491
        %v1183 = vpop.f32.mrf.mxu0
        %v1184 = vadd.f32 %v1135, %v1183
        %v1185 = vpop.f32.mrf.mxu0
        %v1186 = vadd.f32 %v1137, %v1185
        %1187 = vdwg.mxu0
        %1188 = vmatpush.bf16.msra.mxu0 %v780
        %1189 = vmatpush.bf16.msra.mxu0 %v778
        %1190 = vmatpush.bf16.msra.mxu0 %v776
        %1191 = vmatpush.bf16.msra.mxu0 %v774
        %1192 = vmatpush.bf16.msra.mxu0 %v772
        %1193 = vmatpush.bf16.msra.mxu0 %v770
        %1194 = vmatpush.bf16.msra.mxu0 %v768
        %1195 = vmatpush.bf16.msra.mxu0 %v766
        %1196 = vmatmul.bf16.gmra.mxu0 %v464
        %v1197 = vpop.f32.mrf.mxu0
        %v1198 = vadd.f32 %v1149, %v1197
        %v1199 = vpop.f32.mrf.mxu0
        %v1200 = vadd.f32 %v1151, %v1199
        %1201 = vmatmul.bf16.gmra.mxu0 %v468
        %v1202 = vpop.f32.mrf.mxu0
        %v1203 = vadd.f32 %v1154, %v1202
        %v1204 = vpop.f32.mrf.mxu0
        %v1205 = vadd.f32 %v1156, %v1204
        %1206 = vmatmul.bf16.gmra.mxu0 %v472
        %v1207 = vpop.f32.mrf.mxu0
        %v1208 = vadd.f32 %v1159, %v1207
        %v1209 = vpop.f32.mrf.mxu0
        %v1210 = vadd.f32 %v1161, %v1209
        %1211 = vmatmul.bf16.gmra.mxu0 %v476
        %v1212 = vpop.f32.mrf.mxu0
        %v1213 = vadd.f32 %v1164, %v1212
        %v1214 = vpop.f32.mrf.mxu0
        %v1215 = vadd.f32 %v1166, %v1214
        %1216 = vmatmul.bf16.gmra.mxu0 %v480
        %v1217 = vpop.f32.mrf.mxu0
        %v1218 = vadd.f32 %v1169, %v1217
        %v1219 = vpop.f32.mrf.mxu0
        %v1220 = vadd.f32 %v1171, %v1219
        %1221 = vmatmul.bf16.gmra.mxu0 %v484
        %v1222 = vpop.f32.mrf.mxu0
        %v1223 = vadd.f32 %v1174, %v1222
        %v1224 = vpop.f32.mrf.mxu0
        %v1225 = vadd.f32 %v1176, %v1224
        %1226 = vmatmul.bf16.gmra.mxu0 %v488
        %v1227 = vpop.f32.mrf.mxu0
        %v1228 = vadd.f32 %v1179, %v1227
        %v1229 = vpop.f32.mrf.mxu0
        %v1230 = vadd.f32 %v1181, %v1229
        %1231 = vmatmul.bf16.gmra.mxu0 %v492
        %v1232 = vpop.f32.mrf.mxu0
        %v1233 = vadd.f32 %v1184, %v1232
        %v1234 = vpop.f32.mrf.mxu0
        %v1235 = vadd.f32 %v1186, %v1234
        %1236 = vdwg.mxu0
        %p1237 = scmp.eq.s32.totalorder %s28, 0
        // Predicated region
        $region45: #{tpu_custom_call.1} parent=31 // pred_check
          %p1238 = pneg %p1237
        $region46: #{tpu_custom_call.1} parent=31 // pred_check_branch
          %1240 = sbr.rel (%p1238) target = $region48
        $region47: #{tpu_custom_call.1} parent=31 // pred_region
          %1241 = vst [vmem:[#allocation2] sm:$0xff] %v1002
          %1242 = vst [vmem:[#allocation2 + $0x8] sm:$0xff] %v1198
          %1243 = vst [vmem:[#allocation2 + $0x10] sm:$0xff] %v1004
          %1244 = vst [vmem:[#allocation2 + $0x18] sm:$0xff] %v1200
          %1245 = vst [vmem:[#allocation2 + $0x20] sm:$0xff] %v1007
          %1246 = vst [vmem:[#allocation2 + $0x28] sm:$0xff] %v1203
          %1247 = vst [vmem:[#allocation2 + $0x30] sm:$0xff] %v1009
          %1248 = vst [vmem:[#allocation2 + $0x38] sm:$0xff] %v1205
          %1249 = vst [vmem:[#allocation2 + $0x40] sm:$0xff] %v1012
          %1250 = vst [vmem:[#allocation2 + $0x48] sm:$0xff] %v1208
          %1251 = vst [vmem:[#allocation2 + $0x50] sm:$0xff] %v1014
          %1252 = vst [vmem:[#allocation2 + $0x58] sm:$0xff] %v1210
          %1253 = vst [vmem:[#allocation2 + $0x60] sm:$0xff] %v1017
          %1254 = vst [vmem:[#allocation2 + $0x68] sm:$0xff] %v1213
          %1255 = vst [vmem:[#allocation2 + $0x70] sm:$0xff] %v1019
          %1256 = vst [vmem:[#allocation2 + $0x78] sm:$0xff] %v1215
          %1257 = vst [vmem:[#allocation2 + $0x80] sm:$0xff] %v1022
          %1258 = vst [vmem:[#allocation2 + $0x88] sm:$0xff] %v1218
          %1259 = vst [vmem:[#allocation2 + $0x90] sm:$0xff] %v1024
          %1260 = vst [vmem:[#allocation2 + $0x98] sm:$0xff] %v1220
          %1261 = vst [vmem:[#allocation2 + $0xa0] sm:$0xff] %v1027
          %1262 = vst [vmem:[#allocation2 + $0xa8] sm:$0xff] %v1223
          %1263 = vst [vmem:[#allocation2 + $0xb0] sm:$0xff] %v1029
          %1264 = vst [vmem:[#allocation2 + $0xb8] sm:$0xff] %v1225
          %1265 = vst [vmem:[#allocation2 + $0xc0] sm:$0xff] %v1032
          %1266 = vst [vmem:[#allocation2 + $0xc8] sm:$0xff] %v1228
          %1267 = vst [vmem:[#allocation2 + $0xd0] sm:$0xff] %v1034
          %1268 = vst [vmem:[#allocation2 + $0xd8] sm:$0xff] %v1230
          %1269 = vst [vmem:[#allocation2 + $0xe0] sm:$0xff] %v1037
          %1270 = vst [vmem:[#allocation2 + $0xe8] sm:$0xff] %v1233
          %1271 = vst [vmem:[#allocation2 + $0xf0] sm:$0xff] %v1039
          %1272 = vst [vmem:[#allocation2 + $0xf8] sm:$0xff] %v1235
        $region48: #{tpu_custom_call.1} parent=31 // pred_fallthru
          _
        %p1273 = scmp.gt.s32.totalorder %s28, 0
        // Predicated region
        $region49: #{tpu_custom_call.1} parent=31 // pred_check
          %p1274 = pneg %p1273
        $region50: #{tpu_custom_call.1} parent=31 // pred_check_branch
          %1276 = sbr.rel (%p1274) target = $region52
        $region51: #{tpu_custom_call.1} parent=31 // pred_region
          %v1277 = vld [vmem:[#allocation2] sm:$0xff]
          %v1278 = vld [vmem:[#allocation2 + $0x8] sm:$0xff]
          %v1279 = vld [vmem:[#allocation2 + $0x10] sm:$0xff]
          %v1280 = vld [vmem:[#allocation2 + $0x18] sm:$0xff]
          %v1281 = vld [vmem:[#allocation2 + $0x20] sm:$0xff]
          %v1282 = vld [vmem:[#allocation2 + $0x28] sm:$0xff]
          %v1283 = vld [vmem:[#allocation2 + $0x30] sm:$0xff]
          %v1284 = vld [vmem:[#allocation2 + $0x38] sm:$0xff]
          %v1285 = vld [vmem:[#allocation2 + $0x40] sm:$0xff]
          %v1286 = vld [vmem:[#allocation2 + $0x48] sm:$0xff]
          %v1287 = vld [vmem:[#allocation2 + $0x50] sm:$0xff]
          %v1288 = vld [vmem:[#allocation2 + $0x58] sm:$0xff]
          %v1289 = vld [vmem:[#allocation2 + $0x60] sm:$0xff]
          %v1290 = vld [vmem:[#allocation2 + $0x68] sm:$0xff]
          %v1291 = vld [vmem:[#allocation2 + $0x70] sm:$0xff]
          %v1292 = vld [vmem:[#allocation2 + $0x78] sm:$0xff]
          %v1293 = vld [vmem:[#allocation2 + $0x80] sm:$0xff]
          %v1294 = vld [vmem:[#allocation2 + $0x88] sm:$0xff]
          %v1295 = vld [vmem:[#allocation2 + $0x90] sm:$0xff]
          %v1296 = vld [vmem:[#allocation2 + $0x98] sm:$0xff]
          %v1297 = vld [vmem:[#allocation2 + $0xa0] sm:$0xff]
          %v1298 = vld [vmem:[#allocation2 + $0xa8] sm:$0xff]
          %v1299 = vld [vmem:[#allocation2 + $0xb0] sm:$0xff]
          %v1300 = vld [vmem:[#allocation2 + $0xb8] sm:$0xff]
          %v1301 = vld [vmem:[#allocation2 + $0xc0] sm:$0xff]
          %v1302 = vld [vmem:[#allocation2 + $0xc8] sm:$0xff]
          %v1303 = vld [vmem:[#allocation2 + $0xd0] sm:$0xff]
          %v1304 = vld [vmem:[#allocation2 + $0xd8] sm:$0xff]
          %v1305 = vld [vmem:[#allocation2 + $0xe0] sm:$0xff]
          %v1306 = vld [vmem:[#allocation2 + $0xe8] sm:$0xff]
          %v1307 = vld [vmem:[#allocation2 + $0xf0] sm:$0xff]
          %v1308 = vld [vmem:[#allocation2 + $0xf8] sm:$0xff]
          %v1309 = vadd.f32 %v1277, %v1002
          %v1310 = vadd.f32 %v1278, %v1198
          %v1311 = vadd.f32 %v1279, %v1004
          %v1312 = vadd.f32 %v1280, %v1200
          %v1313 = vadd.f32 %v1281, %v1007
          %v1314 = vadd.f32 %v1282, %v1203
          %v1315 = vadd.f32 %v1283, %v1009
          %v1316 = vadd.f32 %v1284, %v1205
          %v1317 = vadd.f32 %v1285, %v1012
          %v1318 = vadd.f32 %v1286, %v1208
          %v1319 = vadd.f32 %v1287, %v1014
          %v1320 = vadd.f32 %v1288, %v1210
          %v1321 = vadd.f32 %v1289, %v1017
          %v1322 = vadd.f32 %v1290, %v1213
          %v1323 = vadd.f32 %v1291, %v1019
          %v1324 = vadd.f32 %v1292, %v1215
          %v1325 = vadd.f32 %v1293, %v1022
          %v1326 = vadd.f32 %v1294, %v1218
          %v1327 = vadd.f32 %v1295, %v1024
          %v1328 = vadd.f32 %v1296, %v1220
          %v1329 = vadd.f32 %v1297, %v1027
          %v1330 = vadd.f32 %v1298, %v1223
          %v1331 = vadd.f32 %v1299, %v1029
          %v1332 = vadd.f32 %v1300, %v1225
          %v1333 = vadd.f32 %v1301, %v1032
          %v1334 = vadd.f32 %v1302, %v1228
          %v1335 = vadd.f32 %v1303, %v1034
          %v1336 = vadd.f32 %v1304, %v1230
          %v1337 = vadd.f32 %v1305, %v1037
          %v1338 = vadd.f32 %v1306, %v1233
          %v1339 = vadd.f32 %v1307, %v1039
          %v1340 = vadd.f32 %v1308, %v1235
          %1341 = vst [vmem:[#allocation2] sm:$0xff] %v1309
          %1342 = vst [vmem:[#allocation2 + $0x8] sm:$0xff] %v1310
          %1343 = vst [vmem:[#allocation2 + $0x10] sm:$0xff] %v1311
          %1344 = vst [vmem:[#allocation2 + $0x18] sm:$0xff] %v1312
          %1345 = vst [vmem:[#allocation2 + $0x20] sm:$0xff] %v1313
          %1346 = vst [vmem:[#allocation2 + $0x28] sm:$0xff] %v1314
          %1347 = vst [vmem:[#allocation2 + $0x30] sm:$0xff] %v1315
          %1348 = vst [vmem:[#allocation2 + $0x38] sm:$0xff] %v1316
          %1349 = vst [vmem:[#allocation2 + $0x40] sm:$0xff] %v1317
          %1350 = vst [vmem:[#allocation2 + $0x48] sm:$0xff] %v1318
          %1351 = vst [vmem:[#allocation2 + $0x50] sm:$0xff] %v1319
          %1352 = vst [vmem:[#allocation2 + $0x58] sm:$0xff] %v1320
          %1353 = vst [vmem:[#allocation2 + $0x60] sm:$0xff] %v1321
          %1354 = vst [vmem:[#allocation2 + $0x68] sm:$0xff] %v1322
          %1355 = vst [vmem:[#allocation2 + $0x70] sm:$0xff] %v1323
          %1356 = vst [vmem:[#allocation2 + $0x78] sm:$0xff] %v1324
          %1357 = vst [vmem:[#allocation2 + $0x80] sm:$0xff] %v1325
          %1358 = vst [vmem:[#allocation2 + $0x88] sm:$0xff] %v1326
          %1359 = vst [vmem:[#allocation2 + $0x90] sm:$0xff] %v1327
          %1360 = vst [vmem:[#allocation2 + $0x98] sm:$0xff] %v1328
          %1361 = vst [vmem:[#allocation2 + $0xa0] sm:$0xff] %v1329
          %1362 = vst [vmem:[#allocation2 + $0xa8] sm:$0xff] %v1330
          %1363 = vst [vmem:[#allocation2 + $0xb0] sm:$0xff] %v1331
          %1364 = vst [vmem:[#allocation2 + $0xb8] sm:$0xff] %v1332
          %1365 = vst [vmem:[#allocation2 + $0xc0] sm:$0xff] %v1333
          %1366 = vst [vmem:[#allocation2 + $0xc8] sm:$0xff] %v1334
          %1367 = vst [vmem:[#allocation2 + $0xd0] sm:$0xff] %v1335
          %1368 = vst [vmem:[#allocation2 + $0xd8] sm:$0xff] %v1336
          %1369 = vst [vmem:[#allocation2 + $0xe0] sm:$0xff] %v1337
          %1370 = vst [vmem:[#allocation2 + $0xe8] sm:$0xff] %v1338
          %1371 = vst [vmem:[#allocation2 + $0xf0] sm:$0xff] %v1339
          %1372 = vst [vmem:[#allocation2 + $0xf8] sm:$0xff] %v1340
        $region52: #{tpu_custom_call.1} parent=31 // pred_fallthru
          _
        %p1373 = scmp.eq.s32.totalorder %s28, 2
        // Predicated region
        $region53: #{tpu_custom_call.1} parent=31 // pred_check
          %p1374 = pneg %p1373
        $region54: #{tpu_custom_call.1} parent=31 // pred_check_branch
          %1376 = sbr.rel (%p1374) target = $region56
        $region55: #{tpu_custom_call.1} parent=31 // pred_region
          %v1377 = vld [vmem:[#allocation2] sm:$0xff]
          %v1378 = vld [vmem:[#allocation2 + $0x8] sm:$0xff]
          %v1379 = vld [vmem:[#allocation2 + $0x10] sm:$0xff]
          %v1380 = vld [vmem:[#allocation2 + $0x18] sm:$0xff]
          %v1381 = vld [vmem:[#allocation2 + $0x20] sm:$0xff]
          %v1382 = vld [vmem:[#allocation2 + $0x28] sm:$0xff]
          %v1383 = vld [vmem:[#allocation2 + $0x30] sm:$0xff]
          %v1384 = vld [vmem:[#allocation2 + $0x38] sm:$0xff]
          %v1385 = vld [vmem:[#allocation2 + $0x40] sm:$0xff]
          %v1386 = vld [vmem:[#allocation2 + $0x48] sm:$0xff]
          %v1387 = vld [vmem:[#allocation2 + $0x50] sm:$0xff]
          %v1388 = vld [vmem:[#allocation2 + $0x58] sm:$0xff]
          %v1389 = vld [vmem:[#allocation2 + $0x60] sm:$0xff]
          %v1390 = vld [vmem:[#allocation2 + $0x68] sm:$0xff]
          %v1391 = vld [vmem:[#allocation2 + $0x70] sm:$0xff]
          %v1392 = vld [vmem:[#allocation2 + $0x78] sm:$0xff]
          %v1393 = vld [vmem:[#allocation2 + $0x80] sm:$0xff]
          %v1394 = vld [vmem:[#allocation2 + $0x88] sm:$0xff]
          %v1395 = vld [vmem:[#allocation2 + $0x90] sm:$0xff]
          %v1396 = vld [vmem:[#allocation2 + $0x98] sm:$0xff]
          %v1397 = vld [vmem:[#allocation2 + $0xa0] sm:$0xff]
          %v1398 = vld [vmem:[#allocation2 + $0xa8] sm:$0xff]
          %v1399 = vld [vmem:[#allocation2 + $0xb0] sm:$0xff]
          %v1400 = vld [vmem:[#allocation2 + $0xb8] sm:$0xff]
          %v1401 = vld [vmem:[#allocation2 + $0xc0] sm:$0xff]
          %v1402 = vld [vmem:[#allocation2 + $0xc8] sm:$0xff]
          %v1403 = vld [vmem:[#allocation2 + $0xd0] sm:$0xff]
          %v1404 = vld [vmem:[#allocation2 + $0xd8] sm:$0xff]
          %v1405 = vld [vmem:[#allocation2 + $0xe0] sm:$0xff]
          %v1406 = vld [vmem:[#allocation2 + $0xe8] sm:$0xff]
          %v1407 = vld [vmem:[#allocation2 + $0xf0] sm:$0xff]
          %v1408 = vld [vmem:[#allocation2 + $0xf8] sm:$0xff]
          %v1409 = vld [vmem:[#allocation8] sm:$0x3]
          %v1411 = vperm.slane %v1409, 0
          %v1412 = vperm.slane %v1409, 1
          %v1415 = vadd.f32 %v1377, %v1411
          %v1416 = vadd.f32 %v1378, %v1412
          %v1417 = vadd.f32 %v1379, %v1411
          %v1418 = vadd.f32 %v1380, %v1412
          %v1419 = vadd.f32 %v1381, %v1411
          %v1420 = vadd.f32 %v1382, %v1412
          %v1421 = vadd.f32 %v1383, %v1411
          %v1422 = vadd.f32 %v1384, %v1412
          %v1423 = vadd.f32 %v1385, %v1411
          %v1424 = vadd.f32 %v1386, %v1412
          %v1425 = vadd.f32 %v1387, %v1411
          %v1426 = vadd.f32 %v1388, %v1412
          %v1427 = vadd.f32 %v1389, %v1411
          %v1428 = vadd.f32 %v1390, %v1412
          %v1429 = vadd.f32 %v1391, %v1411
          %v1430 = vadd.f32 %v1392, %v1412
          %v1431 = vadd.f32 %v1393, %v1411
          %v1432 = vadd.f32 %v1394, %v1412
          %v1433 = vadd.f32 %v1395, %v1411
          %v1434 = vadd.f32 %v1396, %v1412
          %v1435 = vadd.f32 %v1397, %v1411
          %v1436 = vadd.f32 %v1398, %v1412
          %v1437 = vadd.f32 %v1399, %v1411
          %v1438 = vadd.f32 %v1400, %v1412
          %v1439 = vadd.f32 %v1401, %v1411
          %v1440 = vadd.f32 %v1402, %v1412
          %v1441 = vadd.f32 %v1403, %v1411
          %v1442 = vadd.f32 %v1404, %v1412
          %v1443 = vadd.f32 %v1405, %v1411
          %v1444 = vadd.f32 %v1406, %v1412
          %v1445 = vadd.f32 %v1407, %v1411
          %v1446 = vadd.f32 %v1408, %v1412
          %v1447 = vpack.c.bf16 %v1416, %v1415
          %v1448 = vpack.c.bf16 %v1418, %v1417
          %v1449 = vpack.c.bf16 %v1420, %v1419
          %v1450 = vpack.c.bf16 %v1422, %v1421
          %v1451 = vpack.c.bf16 %v1424, %v1423
          %v1452 = vpack.c.bf16 %v1426, %v1425
          %v1453 = vpack.c.bf16 %v1428, %v1427
          %v1454 = vpack.c.bf16 %v1430, %v1429
          %v1455 = vpack.c.bf16 %v1432, %v1431
          %v1456 = vpack.c.bf16 %v1434, %v1433
          %v1457 = vpack.c.bf16 %v1436, %v1435
          %v1458 = vpack.c.bf16 %v1438, %v1437
          %v1459 = vpack.c.bf16 %v1440, %v1439
          %v1460 = vpack.c.bf16 %v1442, %v1441
          %v1461 = vpack.c.bf16 %v1444, %v1443
          %v1462 = vpack.c.bf16 %v1446, %v1445
          %1463 = vst [vmem:[%s264] sm:$0xff] %v1447
          %1464 = vst [vmem:[%s264 + $0x8] sm:$0xff] %v1448
          %1465 = vst [vmem:[%s264 + $0x10] sm:$0xff] %v1449
          %1466 = vst [vmem:[%s264 + $0x18] sm:$0xff] %v1450
          %1467 = vst [vmem:[%s264 + $0x20] sm:$0xff] %v1451
          %1468 = vst [vmem:[%s264 + $0x28] sm:$0xff] %v1452
          %1469 = vst [vmem:[%s264 + $0x30] sm:$0xff] %v1453
          %1470 = vst [vmem:[%s264 + $0x38] sm:$0xff] %v1454
          %1471 = vst [vmem:[%s264 + $0x40] sm:$0xff] %v1455
          %1472 = vst [vmem:[%s264 + $0x48] sm:$0xff] %v1456
          %1473 = vst [vmem:[%s264 + $0x50] sm:$0xff] %v1457
          %1474 = vst [vmem:[%s264 + $0x58] sm:$0xff] %v1458
          %1475 = vst [vmem:[%s264 + $0x60] sm:$0xff] %v1459
          %1476 = vst [vmem:[%s264 + $0x68] sm:$0xff] %v1460
          %1477 = vst [vmem:[%s264 + $0x70] sm:$0xff] %v1461
          %1478 = vst [vmem:[%s264 + $0x78] sm:$0xff] %v1462
        $region56: #{tpu_custom_call.1} parent=31 // pred_fallthru
          _
        %s1479 = sand.u32 %s118, 1
        %s1480 = scalar_lea.sflag [#allocation5], %s1479
        %s1481 = sand.u32 %s118, 1
        %s1482 = smul.addr %s1481, 128
        %s1483 = scalar_lea.vmem [#allocation9], %s1482
        // Predicated region
        $region57: #{tpu_custom_call.1} parent=31 // pred_check
          %p1484 = pneg %p128
        $region58: #{tpu_custom_call.1} parent=31 // pred_check_branch
          %1486 = sbr.rel (%p1484) target = $region60
        $region59: #{tpu_custom_call.1} parent=31 // pred_region
          %s1487 = smul.u32 16, %s27
          %1489 = vsyncadd %s1480, 0
          %s1490 = smul.addr %s1487, 2
          %s1491 = smul.addr %s1490, 4
          %s1492 = scalar_lea.hbm %s3, %s1491
          %s1493 = sshll.u32 %s1483, 4
          %s1494 = int_to_ptr.vmem [resolvable:$true] %s1493
          %s1495 = sshll.u32 %s1492, 4
          %s1496 = int_to_ptr.hbm [resolvable:$true] %s1495
          %1501 = dma.vmem_to_hbm [thread:$0]  %s1494, 2048, %s1496, %s1480, 128, 128, 8
        $region60: #{tpu_custom_call.1} parent=31 // pred_fallthru
          _
      $region32: #{tpu_custom_call.1} parent=5 // pred_fallthru
        _
      %p1502 = scmp.le.s32.totalorder 2, %s18
      // Predicated region
      $region61: #{tpu_custom_call.1} parent=5 // pred_check
        %p1503 = pneg %p1502
      $region62: #{tpu_custom_call.1} parent=5 // pred_check_branch
        %1505 = sbr.rel (%p1503) target = $region64
      $region63: #{tpu_custom_call.1} parent=5 // pred_region
        %s1506 = ssub.s32 %s18, 2
        // Predicated region
        $region65: #{tpu_custom_call.1} parent=63 // pred_check
          %p1507 = pneg %p134
        $region66: #{tpu_custom_call.1} parent=63 // pred_check_branch
          %1509 = sbr.rel (%p1507) target = $region68
        $region67: #{tpu_custom_call.1} parent=63 // pred_region
          %s1510 = sand.u32 %s119, 1
          %s1511 = scalar_lea.sflag [#allocation5], %s1510
          %s1512 = sand.u32 %s119, 1
          %s1513 = smul.addr %s1512, 128
          %s1514 = scalar_lea.vmem [#allocation9], %s1513
          %1516 = dma.done %s1511, 2048
        $region68: #{tpu_custom_call.1} parent=63 // pred_fallthru
          _
      $region64: #{tpu_custom_call.1} parent=5 // pred_fallthru
        _
    $region6: #{tpu_custom_call.1} parent=1 // loop_footer
      %s22 = sadd.s32 1, %s18
    $region7: #{tpu_custom_call.1} parent=1 // loop_footer_branch
      %17 = sbr.rel target = $region3
    $region8: #{tpu_custom_call.1} parent=1 // loop_exit
      _
    %1517 = vsyncpa [#allocation4], 1
    %s1518 = scalar_lea.sflag [#allocation4], 1
    %1519 = vsyncpa %s1518, 1
    %1520 = vsyncpa [#allocation7], 1
    %s1521 = scalar_lea.sflag [#allocation7], 1
    %1522 = vsyncpa %s1521, 1
    %1523 = vsyncpa [#allocation5], 1
    %s1524 = scalar_lea.sflag [#allocation5], 1
    %1525 = vsyncpa %s1524, 1

</llo_original>
